<compile_context>
chip_gen: v7x
topology: tpu7x:2x2x1
jax: 0.10.0
libtpu: 0.0.40
codegen_flags: <defaults>
</compile_context>

<pallas_src>
import functools

import jax
import jax.numpy as jnp
from jax import lax
from jax.experimental import pallas as pl
from jax.experimental.pallas import tpu as pltpu


def _sigmoid_eup(x):
    # sigmoid(x) = 0.5 * tanh(x/2) + 0.5 — single EUP tanh, no f32 divide.
    # Differs from 1/(1+exp(-x)) by <~1e-7 absolute, well inside test tolerance.
    return 0.5 * jnp.tanh(0.5 * x) + 0.5


def _sigmoid_exact(x):
    # Used only by the pure-JAX reference (mirrors torch.sigmoid exactly).
    return 1.0 / (1.0 + jnp.exp(-x))


def _act_kernel(x_ref, p_ref, out_ref, *, max_steps, input_size, hidden):
    # x_ref:   [B, I]
    # p_ref:   [rows_pad, 4H] packed parameter slab:
    #            rows 0:I        -> W_ih^T           [I, 4H]
    #            rows I:I+H      -> W_hh^T           [H, 4H]
    #            row  I+H        -> b_ih + b_hh      [1, 4H]
    #            row  I+H+1      -> lanes 0:H = w_halt, lane H = b_halt
    # out_ref: [B, 4H] packed output slab:
    #            lanes 0:H   -> avg_outputs
    #            lane  H     -> halting_probability
    #            lane  H+1   -> n_updates
    I = input_size
    H = hidden
    B = x_ref.shape[0]

    x = x_ref[...]
    w_ih = p_ref[0:I, :]                          # [I, 4H]
    w_hh = p_ref[I:I + H, :]                      # [H, 4H]
    b = p_ref[I + H:I + H + 1, :]                 # [1, 4H]
    halt_row = p_ref[I + H + 1:I + H + 2, :]      # [1, 4H]
    w_halt = halt_row[:, 0:H]                     # [1, H]
    b_halt = halt_row[:, H:H + 1]                 # [1, 1]

    # Loop-invariant input projection + combined bias, hoisted out of the loop.
    x_proj = jnp.dot(x, w_ih, preferred_element_type=jnp.float32) + b    # [B, 4H]

    h0 = jnp.zeros((B, H), jnp.float32)
    c0 = jnp.zeros((B, H), jnp.float32)
    hp0 = jnp.zeros((B, 1), jnp.float32)
    rem0 = jnp.zeros((B, 1), jnp.float32)
    nu0 = jnp.zeros((B, 1), jnp.float32)
    hsum0 = jnp.zeros((B, H), jnp.float32)
    run0 = jnp.ones((1, 1), jnp.float32)   # 1.0 while the torch loop would still run

    def step(_, state):
        h, c, hp, rem, nu, hsum, running = state

        # Recurrent projection: one [B,H]x[H,4H] MXU matmul per step.
        gates = x_proj + jnp.dot(h, w_hh, preferred_element_type=jnp.float32)  # [B,4H]

        # Full-vreg activations (one sigmoid, one tanh on [B,4H]); slice after.
        sig = _sigmoid_eup(gates)
        tnh = jnp.tanh(gates)
        i_g = sig[:, 0 * H:1 * H]
        f_g = sig[:, 1 * H:2 * H]
        g_g = tnh[:, 2 * H:3 * H]
        o_g = sig[:, 3 * H:4 * H]

        # h/c are NOT gated: their post-break evolution is unobservable since
        # every output accumulator below is gated by `running`.
        c = f_g * c + i_g * g_g
        h = o_g * jnp.tanh(c)

        # Halting head (side chain, off the h/c critical path): lane-dense VPU
        # multiply + lane reduction instead of a width-1 MXU matmul.
        logit = jnp.sum(h * w_halt, axis=-1, keepdims=True) + b_halt            # [B,1]
        y = _sigmoid_eup(logit)

        # Gated accumulator updates (break emulation), simplified algebraically.
        hp = hp + running * (y * (1.0 - hp))
        rem = rem + running * (1.0 - hp)        # uses hp AFTER the update (torch order)
        nu = nu + running
        hsum = hsum + running * h

        # torch: `if halting_probability.min() > 1 - 0.01: break` (checked after update)
        cont = (jnp.min(hp, keepdims=True) <= (1.0 - 0.01)).astype(jnp.float32)  # [1,1]
        running = running * cont
        return (h, c, hp, rem, nu, hsum, running)

    state = (h0, c0, hp0, rem0, nu0, hsum0, run0)
    h, c, hp, rem, nu, hsum, running = lax.fori_loop(
        0, max_steps, step, state, unroll=True)

    # avg = sum_t(h_t) * remainders_final / n_updates  (exact divide, once).
    avg = (hsum * rem) / nu

    # Single lane-dense packed output tile.
    out_ref[...] = jnp.zeros_like(out_ref)
    out_ref[:, 0:H] = avg.astype(out_ref.dtype)
    out_ref[:, H:H + 1] = hp.astype(out_ref.dtype)
    out_ref[:, H + 1:H + 2] = nu.astype(out_ref.dtype)


def adaptive_computation_time(x, w_ih, w_hh, b_ih, b_hh, w_halt, b_halt, *, max_steps):
    """x: [B, I]; w_ih: [4H, I]; w_hh: [4H, H]; b_ih, b_hh: [4H];
    w_halt: [1, H]; b_halt: [1]
    -> (avg_outputs [B, H], halting_probability [B, 1], n_updates [B, 1])."""
    B, I = x.shape
    H = w_hh.shape[1]
    G = 4 * H

    # Pack all loop-invariant parameters into one [rows_pad, 4H] f32 slab.
    n_rows = I + H + 2
    rows_pad = ((n_rows + 7) // 8) * 8
    slab = jnp.zeros((rows_pad, G), jnp.float32)
    slab = slab.at[0:I, :].set(w_ih.T.astype(jnp.float32))
    slab = slab.at[I:I + H, :].set(w_hh.T.astype(jnp.float32))
    slab = slab.at[I + H, :].set((b_ih + b_hh).astype(jnp.float32))
    slab = slab.at[I + H + 1, 0:H].set(w_halt.reshape(H).astype(jnp.float32))
    slab = slab.at[I + H + 1, H].set(b_halt.reshape(()).astype(jnp.float32))

    kernel = functools.partial(_act_kernel, max_steps=max_steps,
                               input_size=I, hidden=H)

    out = pl.pallas_call(
        kernel,
        out_shape=jax.ShapeDtypeStruct((B, G), jnp.float32),
        grid_spec=pltpu.PrefetchScalarGridSpec(
            num_scalar_prefetch=0,
            grid=(1,),
            in_specs=[
                pl.BlockSpec((B, I), lambda i: (0, 0)),
                pl.BlockSpec((rows_pad, G), lambda i: (0, 0)),
            ],
            out_specs=pl.BlockSpec((B, G), lambda i: (0, 0)),
        ),
        compiler_params=pltpu.CompilerParams(
            dimension_semantics=("arbitrary",)),
    )(x.astype(jnp.float32), slab)

    avg = out[:, 0:H].astype(x.dtype)
    hp = out[:, H:H + 1].astype(x.dtype)
    nu = out[:, H + 1:H + 2].astype(x.dtype)
    return avg, hp, nu


def _ref_forward(x, w_ih, w_hh, b_ih, b_hh, w_halt, b_halt, max_steps):
    """Pure-JAX mirror of the PyTorch forward (with an actual early break)."""
    B, _ = x.shape
    H = w_hh.shape[1]
    h = jnp.zeros((B, H), jnp.float32)
    c = jnp.zeros((B, H), jnp.float32)
    hp = jnp.zeros((B, 1), jnp.float32)
    rem = jnp.zeros((B, 1), jnp.float32)
    nu = jnp.zeros((B, 1), jnp.float32)
    outs = []
    for _ in range(max_steps):
        gates = x @ w_ih.T + b_ih + h @ w_hh.T + b_hh
        i_g = _sigmoid_exact(gates[:, 0 * H:1 * H])
        f_g = _sigmoid_exact(gates[:, 1 * H:2 * H])
        g_g = jnp.tanh(gates[:, 2 * H:3 * H])
        o_g = _sigmoid_exact(gates[:, 3 * H:4 * H])
        c = f_g * c + i_g * g_g
        h = o_g * jnp.tanh(c)
        y = _sigmoid_exact(h @ w_halt.T + b_halt)
        hp = hp + y * (1.0 - hp)
        rem = rem + (1.0 - hp)
        nu = nu + 1.0
        outs.append(h[:, None, :])
        if float(jnp.min(hp)) > 1.0 - 0.01:
            break
    outs = jnp.concatenate(outs, axis=1)                     # [B, T, H]
    avg = jnp.sum(outs * rem[:, :, None], axis=1) / nu
    return avg, hp, nu


if __name__ == "__main__":
    # Small shapes implied by the module: batch=2, input_size=16, hidden=32, max_steps=8.
    B, I, H, MAX_STEPS = 2, 16, 32, 8

    key = jax.random.PRNGKey(0)
    ks = jax.random.split(key, 7)
    lim = 1.0 / (H ** 0.5)

    x = jax.random.normal(ks[0], (B, I), dtype=jnp.float32)
    # PyTorch LSTMCell layout: weight_ih [4H, I], weight_hh [4H, H], gate order i,f,g,o.
    w_ih = jax.random.uniform(ks[1], (4 * H, I), minval=-lim, maxval=lim, dtype=jnp.float32)
    w_hh = jax.random.uniform(ks[2], (4 * H, H), minval=-lim, maxval=lim, dtype=jnp.float32)
    b_ih = jax.random.uniform(ks[3], (4 * H,), minval=-lim, maxval=lim, dtype=jnp.float32)
    b_hh = jax.random.uniform(ks[4], (4 * H,), minval=-lim, maxval=lim, dtype=jnp.float32)
    w_halt = jax.random.uniform(ks[5], (1, H), minval=-lim, maxval=lim, dtype=jnp.float32)
    # Bias the halting unit negative so the data-dependent break stays far from the
    # 0.99 threshold — keeps kernel/reference step counts identical under fp noise.
    b_halt = jax.random.uniform(ks[6], (1,), minval=-lim, maxval=lim, dtype=jnp.float32) - 2.0

    avg, hp, nu = adaptive_computation_time(
        x, w_ih, w_hh, b_ih, b_hh, w_halt, b_halt, max_steps=MAX_STEPS)
    jax.block_until_ready((avg, hp, nu))

    ref_avg, ref_hp, ref_nu = _ref_forward(
        x, w_ih, w_hh, b_ih, b_hh, w_halt, b_halt, MAX_STEPS)

    assert avg.shape == (B, H) and hp.shape == (B, 1) and nu.shape == (B, 1)
    assert jnp.allclose(nu, ref_nu, atol=1e-6), "n_updates mismatch vs JAX reference"
    # Slightly relaxed vs 1e-4: kernel uses the tanh-form sigmoid (<=~1e-6 drift).
    assert jnp.allclose(hp, ref_hp, atol=5e-4, rtol=5e-4), "halting prob mismatch vs JAX reference"
    assert jnp.allclose(avg, ref_avg, atol=5e-4, rtol=5e-4), "avg_outputs mismatch vs JAX reference"

    print("KERNEL_OK")
</pallas_src>

<mosaic_0001>
module attributes {stable_mosaic.version = 11 : i64} {
  func.func @_act_kernel(%arg0: i32, %arg1: memref<2x16xf32, #tpu.memory_space<vmem>>, %arg2: memref<56x128xf32, #tpu.memory_space<vmem>>, %arg3: memref<2x128xf32, #tpu.memory_space<vmem>>) attributes {dimension_semantics = [#tpu.dimension_semantics<arbitrary>], iteration_bounds = array<i64: 1>, scalar_prefetch = 0 : i64, scratch_operands = 0 : i64, tpu.core_type = #tpu.core_type<tc>, window_params = [{pipeline_mode = #tpu.pipeline_mode<synchronous>, transform_indices = @transform_0, window_bounds = array<i64: 2, 16>}, {pipeline_mode = #tpu.pipeline_mode<synchronous>, transform_indices = @transform_1, window_bounds = array<i64: 56, 128>}, {pipeline_mode = #tpu.pipeline_mode<synchronous>, transform_indices = @transform_2, window_bounds = array<i64: 2, 128>}]} {
    %c0 = arith.constant 0 : index
    %c0_0 = arith.constant 0 : index
    %0 = vector.load %arg1[%c0, %c0_0] : memref<2x16xf32, #tpu.memory_space<vmem>>, vector<2x16xf32>
    %c0_1 = arith.constant 0 : index
    %c0_2 = arith.constant 0 : index
    %1 = vector.load %arg2[%c0_1, %c0_2] : memref<56x128xf32, #tpu.memory_space<vmem>>, vector<16x128xf32>
    %c16 = arith.constant 16 : index
    %c0_3 = arith.constant 0 : index
    %2 = vector.load %arg2[%c16, %c0_3] : memref<56x128xf32, #tpu.memory_space<vmem>>, vector<32x128xf32>
    %c48 = arith.constant 48 : index
    %c0_4 = arith.constant 0 : index
    %3 = vector.load %arg2[%c48, %c0_4] : memref<56x128xf32, #tpu.memory_space<vmem>>, vector<1x128xf32>
    %c49 = arith.constant 49 : index
    %c0_5 = arith.constant 0 : index
    %4 = vector.load %arg2[%c49, %c0_5] : memref<56x128xf32, #tpu.memory_space<vmem>>, vector<1x128xf32>
    %5 = vector.extract_strided_slice %4 {offsets = [0, 0], sizes = [1, 32], strides = [1, 1]} : vector<1x128xf32> to vector<1x32xf32>
    %6 = vector.extract_strided_slice %4 {offsets = [0, 32], sizes = [1, 1], strides = [1, 1]} : vector<1x128xf32> to vector<1x1xf32>
    %cst = arith.constant dense<0.000000e+00> : vector<2x128xf32>
    %7 = tpu.matmul %0, %1, %cst {dimension_numbers = #tpu.dot_dimension_numbers<[1], [0], [0], [1], [0, 0, 1, 1], [], []>} : vector<2x16xf32>, vector<16x128xf32>, vector<2x128xf32> -> vector<2x128xf32>
    %8 = vector.broadcast %3 : vector<1x128xf32> to vector<2x128xf32>
    %9 = arith.addf %7, %8 : vector<2x128xf32>
    %cst_6 = arith.constant 0.000000e+00 : f32
    %10 = vector.broadcast %cst_6 : f32 to vector<2x32xf32>
    %cst_7 = arith.constant 0.000000e+00 : f32
    %11 = vector.broadcast %cst_7 : f32 to vector<2x32xf32>
    %cst_8 = arith.constant 0.000000e+00 : f32
    %12 = vector.broadcast %cst_8 : f32 to vector<2x1xf32>
    %cst_9 = arith.constant 0.000000e+00 : f32
    %13 = vector.broadcast %cst_9 : f32 to vector<2x1xf32>
    %cst_10 = arith.constant 0.000000e+00 : f32
    %14 = vector.broadcast %cst_10 : f32 to vector<2x1xf32>
    %cst_11 = arith.constant 0.000000e+00 : f32
    %15 = vector.broadcast %cst_11 : f32 to vector<2x32xf32>
    %cst_12 = arith.constant 1.000000e+00 : f32
    %16 = vector.broadcast %cst_12 : f32 to vector<1x1xf32>
    %c0_i32 = arith.constant 0 : i32
    %cst_13 = arith.constant dense<0.000000e+00> : vector<2x128xf32>
    %17 = tpu.matmul %10, %2, %cst_13 {dimension_numbers = #tpu.dot_dimension_numbers<[1], [0], [0], [1], [0, 0, 1, 1], [], []>} : vector<2x32xf32>, vector<32x128xf32>, vector<2x128xf32> -> vector<2x128xf32>
    %18 = arith.addf %9, %17 : vector<2x128xf32>
    %cst_14 = arith.constant 5.000000e-01 : f32
    %19 = vector.broadcast %cst_14 : f32 to vector<2x128xf32>
    %20 = arith.mulf %19, %18 : vector<2x128xf32>
    %21 = math.tanh %20 : vector<2x128xf32>
    %cst_15 = arith.constant 5.000000e-01 : f32
    %22 = vector.broadcast %cst_15 : f32 to vector<2x128xf32>
    %23 = arith.mulf %22, %21 : vector<2x128xf32>
    %cst_16 = arith.constant 5.000000e-01 : f32
    %24 = vector.broadcast %cst_16 : f32 to vector<2x128xf32>
    %25 = arith.addf %23, %24 : vector<2x128xf32>
    %26 = math.tanh %18 : vector<2x128xf32>
    %27 = vector.extract_strided_slice %25 {offsets = [0, 0], sizes = [2, 32], strides = [1, 1]} : vector<2x128xf32> to vector<2x32xf32>
    %28 = vector.extract_strided_slice %25 {offsets = [0, 32], sizes = [2, 32], strides = [1, 1]} : vector<2x128xf32> to vector<2x32xf32>
    %29 = vector.extract_strided_slice %26 {offsets = [0, 64], sizes = [2, 32], strides = [1, 1]} : vector<2x128xf32> to vector<2x32xf32>
    %30 = vector.extract_strided_slice %25 {offsets = [0, 96], sizes = [2, 32], strides = [1, 1]} : vector<2x128xf32> to vector<2x32xf32>
    %31 = arith.mulf %28, %11 : vector<2x32xf32>
    %32 = arith.mulf %27, %29 : vector<2x32xf32>
    %33 = arith.addf %31, %32 : vector<2x32xf32>
    %34 = math.tanh %33 : vector<2x32xf32>
    %35 = arith.mulf %30, %34 : vector<2x32xf32>
    %36 = vector.broadcast %5 : vector<1x32xf32> to vector<2x32xf32>
    %37 = arith.mulf %35, %36 : vector<2x32xf32>
    %cst_17 = arith.constant dense<0.000000e+00> : vector<2xf32>
    %38 = vector.multi_reduction <add>, %37, %cst_17 [1] : vector<2x32xf32> to vector<2xf32>
    %39 = vector.shape_cast %38 : vector<2xf32> to vector<2x1xf32>
    %40 = vector.broadcast %6 : vector<1x1xf32> to vector<2x1xf32>
    %41 = arith.addf %39, %40 : vector<2x1xf32>
    %cst_18 = arith.constant 5.000000e-01 : f32
    %42 = vector.broadcast %cst_18 : f32 to vector<2x1xf32>
    %43 = arith.mulf %42, %41 : vector<2x1xf32>
    %44 = math.tanh %43 : vector<2x1xf32>
    %cst_19 = arith.constant 5.000000e-01 : f32
    %45 = vector.broadcast %cst_19 : f32 to vector<2x1xf32>
    %46 = arith.mulf %45, %44 : vector<2x1xf32>
    %cst_20 = arith.constant 5.000000e-01 : f32
    %47 = vector.broadcast %cst_20 : f32 to vector<2x1xf32>
    %48 = arith.addf %46, %47 : vector<2x1xf32>
    %cst_21 = arith.constant 1.000000e+00 : f32
    %49 = vector.broadcast %cst_21 : f32 to vector<2x1xf32>
    %50 = arith.subf %49, %12 : vector<2x1xf32>
    %51 = arith.mulf %48, %50 : vector<2x1xf32>
    %52 = vector.broadcast %16 : vector<1x1xf32> to vector<2x1xf32>
    %53 = arith.mulf %52, %51 : vector<2x1xf32>
    %54 = arith.addf %12, %53 : vector<2x1xf32>
    %cst_22 = arith.constant 1.000000e+00 : f32
    %55 = vector.broadcast %cst_22 : f32 to vector<2x1xf32>
    %56 = arith.subf %55, %54 : vector<2x1xf32>
    %57 = vector.broadcast %16 : vector<1x1xf32> to vector<2x1xf32>
    %58 = arith.mulf %57, %56 : vector<2x1xf32>
    %59 = arith.addf %13, %58 : vector<2x1xf32>
    %60 = vector.broadcast %16 : vector<1x1xf32> to vector<2x1xf32>
    %61 = arith.addf %14, %60 : vector<2x1xf32>
    %62 = vector.broadcast %16 : vector<1x1xf32> to vector<2x32xf32>
    %63 = arith.mulf %62, %35 : vector<2x32xf32>
    %64 = arith.addf %15, %63 : vector<2x32xf32>
    %65 = vector.shape_cast %54 : vector<2x1xf32> to vector<1x2x1xf32>
    %cst_23 = arith.constant dense<0x7F800000> : vector<1xf32>
    %66 = vector.multi_reduction <minimumf>, %65, %cst_23 [1, 2] : vector<1x2x1xf32> to vector<1xf32>
    %67 = vector.shape_cast %66 : vector<1xf32> to vector<1x1x1xf32>
    %68 = vector.extract %67[0, 0, 0] : f32 from vector<1x1x1xf32>
    %69 = vector.broadcast %68 : f32 to vector<1x1xf32>
    %cst_24 = arith.constant 9.900000e-01 : f32
    %70 = vector.broadcast %cst_24 : f32 to vector<1x1xf32>
    %71 = arith.cmpf ole, %69, %70 : vector<1x1xf32>
    %72 = arith.extui %71 : vector<1x1xi1> to vector<1x1xi32>
    %73 = arith.sitofp %72 : vector<1x1xi32> to vector<1x1xf32>
    %74 = arith.mulf %16, %73 : vector<1x1xf32>
    %c1_i32 = arith.constant 1 : i32
    %cst_25 = arith.constant dense<0.000000e+00> : vector<2x128xf32>
    %75 = tpu.matmul %35, %2, %cst_25 {dimension_numbers = #tpu.dot_dimension_numbers<[1], [0], [0], [1], [0, 0, 1, 1], [], []>} : vector<2x32xf32>, vector<32x128xf32>, vector<2x128xf32> -> vector<2x128xf32>
    %76 = arith.addf %9, %75 : vector<2x128xf32>
    %cst_26 = arith.constant 5.000000e-01 : f32
    %77 = vector.broadcast %cst_26 : f32 to vector<2x128xf32>
    %78 = arith.mulf %77, %76 : vector<2x128xf32>
    %79 = math.tanh %78 : vector<2x128xf32>
    %cst_27 = arith.constant 5.000000e-01 : f32
    %80 = vector.broadcast %cst_27 : f32 to vector<2x128xf32>
    %81 = arith.mulf %80, %79 : vector<2x128xf32>
    %cst_28 = arith.constant 5.000000e-01 : f32
    %82 = vector.broadcast %cst_28 : f32 to vector<2x128xf32>
    %83 = arith.addf %81, %82 : vector<2x128xf32>
    %84 = math.tanh %76 : vector<2x128xf32>
    %85 = vector.extract_strided_slice %83 {offsets = [0, 0], sizes = [2, 32], strides = [1, 1]} : vector<2x128xf32> to vector<2x32xf32>
    %86 = vector.extract_strided_slice %83 {offsets = [0, 32], sizes = [2, 32], strides = [1, 1]} : vector<2x128xf32> to vector<2x32xf32>
    %87 = vector.extract_strided_slice %84 {offsets = [0, 64], sizes = [2, 32], strides = [1, 1]} : vector<2x128xf32> to vector<2x32xf32>
    %88 = vector.extract_strided_slice %83 {offsets = [0, 96], sizes = [2, 32], strides = [1, 1]} : vector<2x128xf32> to vector<2x32xf32>
    %89 = arith.mulf %86, %33 : vector<2x32xf32>
    %90 = arith.mulf %85, %87 : vector<2x32xf32>
    %91 = arith.addf %89, %90 : vector<2x32xf32>
    %92 = math.tanh %91 : vector<2x32xf32>
    %93 = arith.mulf %88, %92 : vector<2x32xf32>
    %94 = vector.broadcast %5 : vector<1x32xf32> to vector<2x32xf32>
    %95 = arith.mulf %93, %94 : vector<2x32xf32>
    %cst_29 = arith.constant dense<0.000000e+00> : vector<2xf32>
    %96 = vector.multi_reduction <add>, %95, %cst_29 [1] : vector<2x32xf32> to vector<2xf32>
    %97 = vector.shape_cast %96 : vector<2xf32> to vector<2x1xf32>
    %98 = vector.broadcast %6 : vector<1x1xf32> to vector<2x1xf32>
    %99 = arith.addf %97, %98 : vector<2x1xf32>
    %cst_30 = arith.constant 5.000000e-01 : f32
    %100 = vector.broadcast %cst_30 : f32 to vector<2x1xf32>
    %101 = arith.mulf %100, %99 : vector<2x1xf32>
    %102 = math.tanh %101 : vector<2x1xf32>
    %cst_31 = arith.constant 5.000000e-01 : f32
    %103 = vector.broadcast %cst_31 : f32 to vector<2x1xf32>
    %104 = arith.mulf %103, %102 : vector<2x1xf32>
    %cst_32 = arith.constant 5.000000e-01 : f32
    %105 = vector.broadcast %cst_32 : f32 to vector<2x1xf32>
    %106 = arith.addf %104, %105 : vector<2x1xf32>
    %cst_33 = arith.constant 1.000000e+00 : f32
    %107 = vector.broadcast %cst_33 : f32 to vector<2x1xf32>
    %108 = arith.subf %107, %54 : vector<2x1xf32>
    %109 = arith.mulf %106, %108 : vector<2x1xf32>
    %110 = vector.broadcast %74 : vector<1x1xf32> to vector<2x1xf32>
    %111 = arith.mulf %110, %109 : vector<2x1xf32>
    %112 = arith.addf %54, %111 : vector<2x1xf32>
    %cst_34 = arith.constant 1.000000e+00 : f32
    %113 = vector.broadcast %cst_34 : f32 to vector<2x1xf32>
    %114 = arith.subf %113, %112 : vector<2x1xf32>
    %115 = vector.broadcast %74 : vector<1x1xf32> to vector<2x1xf32>
    %116 = arith.mulf %115, %114 : vector<2x1xf32>
    %117 = arith.addf %59, %116 : vector<2x1xf32>
    %118 = vector.broadcast %74 : vector<1x1xf32> to vector<2x1xf32>
    %119 = arith.addf %61, %118 : vector<2x1xf32>
    %120 = vector.broadcast %74 : vector<1x1xf32> to vector<2x32xf32>
    %121 = arith.mulf %120, %93 : vector<2x32xf32>
    %122 = arith.addf %64, %121 : vector<2x32xf32>
    %123 = vector.shape_cast %112 : vector<2x1xf32> to vector<1x2x1xf32>
    %cst_35 = arith.constant dense<0x7F800000> : vector<1xf32>
    %124 = vector.multi_reduction <minimumf>, %123, %cst_35 [1, 2] : vector<1x2x1xf32> to vector<1xf32>
    %125 = vector.shape_cast %124 : vector<1xf32> to vector<1x1x1xf32>
    %126 = vector.extract %125[0, 0, 0] : f32 from vector<1x1x1xf32>
    %127 = vector.broadcast %126 : f32 to vector<1x1xf32>
    %cst_36 = arith.constant 9.900000e-01 : f32
    %128 = vector.broadcast %cst_36 : f32 to vector<1x1xf32>
    %129 = arith.cmpf ole, %127, %128 : vector<1x1xf32>
    %130 = arith.extui %129 : vector<1x1xi1> to vector<1x1xi32>
    %131 = arith.sitofp %130 : vector<1x1xi32> to vector<1x1xf32>
    %132 = arith.mulf %74, %131 : vector<1x1xf32>
    %c2_i32 = arith.constant 2 : i32
    %cst_37 = arith.constant dense<0.000000e+00> : vector<2x128xf32>
    %133 = tpu.matmul %93, %2, %cst_37 {dimension_numbers = #tpu.dot_dimension_numbers<[1], [0], [0], [1], [0, 0, 1, 1], [], []>} : vector<2x32xf32>, vector<32x128xf32>, vector<2x128xf32> -> vector<2x128xf32>
    %134 = arith.addf %9, %133 : vector<2x128xf32>
    %cst_38 = arith.constant 5.000000e-01 : f32
    %135 = vector.broadcast %cst_38 : f32 to vector<2x128xf32>
    %136 = arith.mulf %135, %134 : vector<2x128xf32>
    %137 = math.tanh %136 : vector<2x128xf32>
    %cst_39 = arith.constant 5.000000e-01 : f32
    %138 = vector.broadcast %cst_39 : f32 to vector<2x128xf32>
    %139 = arith.mulf %138, %137 : vector<2x128xf32>
    %cst_40 = arith.constant 5.000000e-01 : f32
    %140 = vector.broadcast %cst_40 : f32 to vector<2x128xf32>
    %141 = arith.addf %139, %140 : vector<2x128xf32>
    %142 = math.tanh %134 : vector<2x128xf32>
    %143 = vector.extract_strided_slice %141 {offsets = [0, 0], sizes = [2, 32], strides = [1, 1]} : vector<2x128xf32> to vector<2x32xf32>
    %144 = vector.extract_strided_slice %141 {offsets = [0, 32], sizes = [2, 32], strides = [1, 1]} : vector<2x128xf32> to vector<2x32xf32>
    %145 = vector.extract_strided_slice %142 {offsets = [0, 64], sizes = [2, 32], strides = [1, 1]} : vector<2x128xf32> to vector<2x32xf32>
    %146 = vector.extract_strided_slice %141 {offsets = [0, 96], sizes = [2, 32], strides = [1, 1]} : vector<2x128xf32> to vector<2x32xf32>
    %147 = arith.mulf %144, %91 : vector<2x32xf32>
    %148 = arith.mulf %143, %145 : vector<2x32xf32>
    %149 = arith.addf %147, %148 : vector<2x32xf32>
    %150 = math.tanh %149 : vector<2x32xf32>
    %151 = arith.mulf %146, %150 : vector<2x32xf32>
    %152 = vector.broadcast %5 : vector<1x32xf32> to vector<2x32xf32>
    %153 = arith.mulf %151, %152 : vector<2x32xf32>
    %cst_41 = arith.constant dense<0.000000e+00> : vector<2xf32>
    %154 = vector.multi_reduction <add>, %153, %cst_41 [1] : vector<2x32xf32> to vector<2xf32>
    %155 = vector.shape_cast %154 : vector<2xf32> to vector<2x1xf32>
    %156 = vector.broadcast %6 : vector<1x1xf32> to vector<2x1xf32>
    %157 = arith.addf %155, %156 : vector<2x1xf32>
    %cst_42 = arith.constant 5.000000e-01 : f32
    %158 = vector.broadcast %cst_42 : f32 to vector<2x1xf32>
    %159 = arith.mulf %158, %157 : vector<2x1xf32>
    %160 = math.tanh %159 : vector<2x1xf32>
    %cst_43 = arith.constant 5.000000e-01 : f32
    %161 = vector.broadcast %cst_43 : f32 to vector<2x1xf32>
    %162 = arith.mulf %161, %160 : vector<2x1xf32>
    %cst_44 = arith.constant 5.000000e-01 : f32
    %163 = vector.broadcast %cst_44 : f32 to vector<2x1xf32>
    %164 = arith.addf %162, %163 : vector<2x1xf32>
    %cst_45 = arith.constant 1.000000e+00 : f32
    %165 = vector.broadcast %cst_45 : f32 to vector<2x1xf32>
    %166 = arith.subf %165, %112 : vector<2x1xf32>
    %167 = arith.mulf %164, %166 : vector<2x1xf32>
    %168 = vector.broadcast %132 : vector<1x1xf32> to vector<2x1xf32>
    %169 = arith.mulf %168, %167 : vector<2x1xf32>
    %170 = arith.addf %112, %169 : vector<2x1xf32>
    %cst_46 = arith.constant 1.000000e+00 : f32
    %171 = vector.broadcast %cst_46 : f32 to vector<2x1xf32>
    %172 = arith.subf %171, %170 : vector<2x1xf32>
    %173 = vector.broadcast %132 : vector<1x1xf32> to vector<2x1xf32>
    %174 = arith.mulf %173, %172 : vector<2x1xf32>
    %175 = arith.addf %117, %174 : vector<2x1xf32>
    %176 = vector.broadcast %132 : vector<1x1xf32> to vector<2x1xf32>
    %177 = arith.addf %119, %176 : vector<2x1xf32>
    %178 = vector.broadcast %132 : vector<1x1xf32> to vector<2x32xf32>
    %179 = arith.mulf %178, %151 : vector<2x32xf32>
    %180 = arith.addf %122, %179 : vector<2x32xf32>
    %181 = vector.shape_cast %170 : vector<2x1xf32> to vector<1x2x1xf32>
    %cst_47 = arith.constant dense<0x7F800000> : vector<1xf32>
    %182 = vector.multi_reduction <minimumf>, %181, %cst_47 [1, 2] : vector<1x2x1xf32> to vector<1xf32>
    %183 = vector.shape_cast %182 : vector<1xf32> to vector<1x1x1xf32>
    %184 = vector.extract %183[0, 0, 0] : f32 from vector<1x1x1xf32>
    %185 = vector.broadcast %184 : f32 to vector<1x1xf32>
    %cst_48 = arith.constant 9.900000e-01 : f32
    %186 = vector.broadcast %cst_48 : f32 to vector<1x1xf32>
    %187 = arith.cmpf ole, %185, %186 : vector<1x1xf32>
    %188 = arith.extui %187 : vector<1x1xi1> to vector<1x1xi32>
    %189 = arith.sitofp %188 : vector<1x1xi32> to vector<1x1xf32>
    %190 = arith.mulf %132, %189 : vector<1x1xf32>
    %c3_i32 = arith.constant 3 : i32
    %cst_49 = arith.constant dense<0.000000e+00> : vector<2x128xf32>
    %191 = tpu.matmul %151, %2, %cst_49 {dimension_numbers = #tpu.dot_dimension_numbers<[1], [0], [0], [1], [0, 0, 1, 1], [], []>} : vector<2x32xf32>, vector<32x128xf32>, vector<2x128xf32> -> vector<2x128xf32>
    %192 = arith.addf %9, %191 : vector<2x128xf32>
    %cst_50 = arith.constant 5.000000e-01 : f32
    %193 = vector.broadcast %cst_50 : f32 to vector<2x128xf32>
    %194 = arith.mulf %193, %192 : vector<2x128xf32>
    %195 = math.tanh %194 : vector<2x128xf32>
    %cst_51 = arith.constant 5.000000e-01 : f32
    %196 = vector.broadcast %cst_51 : f32 to vector<2x128xf32>
    %197 = arith.mulf %196, %195 : vector<2x128xf32>
    %cst_52 = arith.constant 5.000000e-01 : f32
    %198 = vector.broadcast %cst_52 : f32 to vector<2x128xf32>
    %199 = arith.addf %197, %198 : vector<2x128xf32>
    %200 = math.tanh %192 : vector<2x128xf32>
    %201 = vector.extract_strided_slice %199 {offsets = [0, 0], sizes = [2, 32], strides = [1, 1]} : vector<2x128xf32> to vector<2x32xf32>
    %202 = vector.extract_strided_slice %199 {offsets = [0, 32], sizes = [2, 32], strides = [1, 1]} : vector<2x128xf32> to vector<2x32xf32>
    %203 = vector.extract_strided_slice %200 {offsets = [0, 64], sizes = [2, 32], strides = [1, 1]} : vector<2x128xf32> to vector<2x32xf32>
    %204 = vector.extract_strided_slice %199 {offsets = [0, 96], sizes = [2, 32], strides = [1, 1]} : vector<2x128xf32> to vector<2x32xf32>
    %205 = arith.mulf %202, %149 : vector<2x32xf32>
    %206 = arith.mulf %201, %203 : vector<2x32xf32>
    %207 = arith.addf %205, %206 : vector<2x32xf32>
    %208 = math.tanh %207 : vector<2x32xf32>
    %209 = arith.mulf %204, %208 : vector<2x32xf32>
    %210 = vector.broadcast %5 : vector<1x32xf32> to vector<2x32xf32>
    %211 = arith.mulf %209, %210 : vector<2x32xf32>
    %cst_53 = arith.constant dense<0.000000e+00> : vector<2xf32>
    %212 = vector.multi_reduction <add>, %211, %cst_53 [1] : vector<2x32xf32> to vector<2xf32>
    %213 = vector.shape_cast %212 : vector<2xf32> to vector<2x1xf32>
    %214 = vector.broadcast %6 : vector<1x1xf32> to vector<2x1xf32>
    %215 = arith.addf %213, %214 : vector<2x1xf32>
    %cst_54 = arith.constant 5.000000e-01 : f32
    %216 = vector.broadcast %cst_54 : f32 to vector<2x1xf32>
    %217 = arith.mulf %216, %215 : vector<2x1xf32>
    %218 = math.tanh %217 : vector<2x1xf32>
    %cst_55 = arith.constant 5.000000e-01 : f32
    %219 = vector.broadcast %cst_55 : f32 to vector<2x1xf32>
    %220 = arith.mulf %219, %218 : vector<2x1xf32>
    %cst_56 = arith.constant 5.000000e-01 : f32
    %221 = vector.broadcast %cst_56 : f32 to vector<2x1xf32>
    %222 = arith.addf %220, %221 : vector<2x1xf32>
    %cst_57 = arith.constant 1.000000e+00 : f32
    %223 = vector.broadcast %cst_57 : f32 to vector<2x1xf32>
    %224 = arith.subf %223, %170 : vector<2x1xf32>
    %225 = arith.mulf %222, %224 : vector<2x1xf32>
    %226 = vector.broadcast %190 : vector<1x1xf32> to vector<2x1xf32>
    %227 = arith.mulf %226, %225 : vector<2x1xf32>
    %228 = arith.addf %170, %227 : vector<2x1xf32>
    %cst_58 = arith.constant 1.000000e+00 : f32
    %229 = vector.broadcast %cst_58 : f32 to vector<2x1xf32>
    %230 = arith.subf %229, %228 : vector<2x1xf32>
    %231 = vector.broadcast %190 : vector<1x1xf32> to vector<2x1xf32>
    %232 = arith.mulf %231, %230 : vector<2x1xf32>
    %233 = arith.addf %175, %232 : vector<2x1xf32>
    %234 = vector.broadcast %190 : vector<1x1xf32> to vector<2x1xf32>
    %235 = arith.addf %177, %234 : vector<2x1xf32>
    %236 = vector.broadcast %190 : vector<1x1xf32> to vector<2x32xf32>
    %237 = arith.mulf %236, %209 : vector<2x32xf32>
    %238 = arith.addf %180, %237 : vector<2x32xf32>
    %239 = vector.shape_cast %228 : vector<2x1xf32> to vector<1x2x1xf32>
    %cst_59 = arith.constant dense<0x7F800000> : vector<1xf32>
    %240 = vector.multi_reduction <minimumf>, %239, %cst_59 [1, 2] : vector<1x2x1xf32> to vector<1xf32>
    %241 = vector.shape_cast %240 : vector<1xf32> to vector<1x1x1xf32>
    %242 = vector.extract %241[0, 0, 0] : f32 from vector<1x1x1xf32>
    %243 = vector.broadcast %242 : f32 to vector<1x1xf32>
    %cst_60 = arith.constant 9.900000e-01 : f32
    %244 = vector.broadcast %cst_60 : f32 to vector<1x1xf32>
    %245 = arith.cmpf ole, %243, %244 : vector<1x1xf32>
    %246 = arith.extui %245 : vector<1x1xi1> to vector<1x1xi32>
    %247 = arith.sitofp %246 : vector<1x1xi32> to vector<1x1xf32>
    %248 = arith.mulf %190, %247 : vector<1x1xf32>
    %c4_i32 = arith.constant 4 : i32
    %cst_61 = arith.constant dense<0.000000e+00> : vector<2x128xf32>
    %249 = tpu.matmul %209, %2, %cst_61 {dimension_numbers = #tpu.dot_dimension_numbers<[1], [0], [0], [1], [0, 0, 1, 1], [], []>} : vector<2x32xf32>, vector<32x128xf32>, vector<2x128xf32> -> vector<2x128xf32>
    %250 = arith.addf %9, %249 : vector<2x128xf32>
    %cst_62 = arith.constant 5.000000e-01 : f32
    %251 = vector.broadcast %cst_62 : f32 to vector<2x128xf32>
    %252 = arith.mulf %251, %250 : vector<2x128xf32>
    %253 = math.tanh %252 : vector<2x128xf32>
    %cst_63 = arith.constant 5.000000e-01 : f32
    %254 = vector.broadcast %cst_63 : f32 to vector<2x128xf32>
    %255 = arith.mulf %254, %253 : vector<2x128xf32>
    %cst_64 = arith.constant 5.000000e-01 : f32
    %256 = vector.broadcast %cst_64 : f32 to vector<2x128xf32>
    %257 = arith.addf %255, %256 : vector<2x128xf32>
    %258 = math.tanh %250 : vector<2x128xf32>
    %259 = vector.extract_strided_slice %257 {offsets = [0, 0], sizes = [2, 32], strides = [1, 1]} : vector<2x128xf32> to vector<2x32xf32>
    %260 = vector.extract_strided_slice %257 {offsets = [0, 32], sizes = [2, 32], strides = [1, 1]} : vector<2x128xf32> to vector<2x32xf32>
    %261 = vector.extract_strided_slice %258 {offsets = [0, 64], sizes = [2, 32], strides = [1, 1]} : vector<2x128xf32> to vector<2x32xf32>
    %262 = vector.extract_strided_slice %257 {offsets = [0, 96], sizes = [2, 32], strides = [1, 1]} : vector<2x128xf32> to vector<2x32xf32>
    %263 = arith.mulf %260, %207 : vector<2x32xf32>
    %264 = arith.mulf %259, %261 : vector<2x32xf32>
    %265 = arith.addf %263, %264 : vector<2x32xf32>
    %266 = math.tanh %265 : vector<2x32xf32>
    %267 = arith.mulf %262, %266 : vector<2x32xf32>
    %268 = vector.broadcast %5 : vector<1x32xf32> to vector<2x32xf32>
    %269 = arith.mulf %267, %268 : vector<2x32xf32>
    %cst_65 = arith.constant dense<0.000000e+00> : vector<2xf32>
    %270 = vector.multi_reduction <add>, %269, %cst_65 [1] : vector<2x32xf32> to vector<2xf32>
    %271 = vector.shape_cast %270 : vector<2xf32> to vector<2x1xf32>
    %272 = vector.broadcast %6 : vector<1x1xf32> to vector<2x1xf32>
    %273 = arith.addf %271, %272 : vector<2x1xf32>
    %cst_66 = arith.constant 5.000000e-01 : f32
    %274 = vector.broadcast %cst_66 : f32 to vector<2x1xf32>
    %275 = arith.mulf %274, %273 : vector<2x1xf32>
    %276 = math.tanh %275 : vector<2x1xf32>
    %cst_67 = arith.constant 5.000000e-01 : f32
    %277 = vector.broadcast %cst_67 : f32 to vector<2x1xf32>
    %278 = arith.mulf %277, %276 : vector<2x1xf32>
    %cst_68 = arith.constant 5.000000e-01 : f32
    %279 = vector.broadcast %cst_68 : f32 to vector<2x1xf32>
    %280 = arith.addf %278, %279 : vector<2x1xf32>
    %cst_69 = arith.constant 1.000000e+00 : f32
    %281 = vector.broadcast %cst_69 : f32 to vector<2x1xf32>
    %282 = arith.subf %281, %228 : vector<2x1xf32>
    %283 = arith.mulf %280, %282 : vector<2x1xf32>
    %284 = vector.broadcast %248 : vector<1x1xf32> to vector<2x1xf32>
    %285 = arith.mulf %284, %283 : vector<2x1xf32>
    %286 = arith.addf %228, %285 : vector<2x1xf32>
    %cst_70 = arith.constant 1.000000e+00 : f32
    %287 = vector.broadcast %cst_70 : f32 to vector<2x1xf32>
    %288 = arith.subf %287, %286 : vector<2x1xf32>
    %289 = vector.broadcast %248 : vector<1x1xf32> to vector<2x1xf32>
    %290 = arith.mulf %289, %288 : vector<2x1xf32>
    %291 = arith.addf %233, %290 : vector<2x1xf32>
    %292 = vector.broadcast %248 : vector<1x1xf32> to vector<2x1xf32>
    %293 = arith.addf %235, %292 : vector<2x1xf32>
    %294 = vector.broadcast %248 : vector<1x1xf32> to vector<2x32xf32>
    %295 = arith.mulf %294, %267 : vector<2x32xf32>
    %296 = arith.addf %238, %295 : vector<2x32xf32>
    %297 = vector.shape_cast %286 : vector<2x1xf32> to vector<1x2x1xf32>
    %cst_71 = arith.constant dense<0x7F800000> : vector<1xf32>
    %298 = vector.multi_reduction <minimumf>, %297, %cst_71 [1, 2] : vector<1x2x1xf32> to vector<1xf32>
    %299 = vector.shape_cast %298 : vector<1xf32> to vector<1x1x1xf32>
    %300 = vector.extract %299[0, 0, 0] : f32 from vector<1x1x1xf32>
    %301 = vector.broadcast %300 : f32 to vector<1x1xf32>
    %cst_72 = arith.constant 9.900000e-01 : f32
    %302 = vector.broadcast %cst_72 : f32 to vector<1x1xf32>
    %303 = arith.cmpf ole, %301, %302 : vector<1x1xf32>
    %304 = arith.extui %303 : vector<1x1xi1> to vector<1x1xi32>
    %305 = arith.sitofp %304 : vector<1x1xi32> to vector<1x1xf32>
    %306 = arith.mulf %248, %305 : vector<1x1xf32>
    %c5_i32 = arith.constant 5 : i32
    %cst_73 = arith.constant dense<0.000000e+00> : vector<2x128xf32>
    %307 = tpu.matmul %267, %2, %cst_73 {dimension_numbers = #tpu.dot_dimension_numbers<[1], [0], [0], [1], [0, 0, 1, 1], [], []>} : vector<2x32xf32>, vector<32x128xf32>, vector<2x128xf32> -> vector<2x128xf32>
    %308 = arith.addf %9, %307 : vector<2x128xf32>
    %cst_74 = arith.constant 5.000000e-01 : f32
    %309 = vector.broadcast %cst_74 : f32 to vector<2x128xf32>
    %310 = arith.mulf %309, %308 : vector<2x128xf32>
    %311 = math.tanh %310 : vector<2x128xf32>
    %cst_75 = arith.constant 5.000000e-01 : f32
    %312 = vector.broadcast %cst_75 : f32 to vector<2x128xf32>
    %313 = arith.mulf %312, %311 : vector<2x128xf32>
    %cst_76 = arith.constant 5.000000e-01 : f32
    %314 = vector.broadcast %cst_76 : f32 to vector<2x128xf32>
    %315 = arith.addf %313, %314 : vector<2x128xf32>
    %316 = math.tanh %308 : vector<2x128xf32>
    %317 = vector.extract_strided_slice %315 {offsets = [0, 0], sizes = [2, 32], strides = [1, 1]} : vector<2x128xf32> to vector<2x32xf32>
    %318 = vector.extract_strided_slice %315 {offsets = [0, 32], sizes = [2, 32], strides = [1, 1]} : vector<2x128xf32> to vector<2x32xf32>
    %319 = vector.extract_strided_slice %316 {offsets = [0, 64], sizes = [2, 32], strides = [1, 1]} : vector<2x128xf32> to vector<2x32xf32>
    %320 = vector.extract_strided_slice %315 {offsets = [0, 96], sizes = [2, 32], strides = [1, 1]} : vector<2x128xf32> to vector<2x32xf32>
    %321 = arith.mulf %318, %265 : vector<2x32xf32>
    %322 = arith.mulf %317, %319 : vector<2x32xf32>
    %323 = arith.addf %321, %322 : vector<2x32xf32>
    %324 = math.tanh %323 : vector<2x32xf32>
    %325 = arith.mulf %320, %324 : vector<2x32xf32>
    %326 = vector.broadcast %5 : vector<1x32xf32> to vector<2x32xf32>
    %327 = arith.mulf %325, %326 : vector<2x32xf32>
    %cst_77 = arith.constant dense<0.000000e+00> : vector<2xf32>
    %328 = vector.multi_reduction <add>, %327, %cst_77 [1] : vector<2x32xf32> to vector<2xf32>
    %329 = vector.shape_cast %328 : vector<2xf32> to vector<2x1xf32>
    %330 = vector.broadcast %6 : vector<1x1xf32> to vector<2x1xf32>
    %331 = arith.addf %329, %330 : vector<2x1xf32>
    %cst_78 = arith.constant 5.000000e-01 : f32
    %332 = vector.broadcast %cst_78 : f32 to vector<2x1xf32>
    %333 = arith.mulf %332, %331 : vector<2x1xf32>
    %334 = math.tanh %333 : vector<2x1xf32>
    %cst_79 = arith.constant 5.000000e-01 : f32
    %335 = vector.broadcast %cst_79 : f32 to vector<2x1xf32>
    %336 = arith.mulf %335, %334 : vector<2x1xf32>
    %cst_80 = arith.constant 5.000000e-01 : f32
    %337 = vector.broadcast %cst_80 : f32 to vector<2x1xf32>
    %338 = arith.addf %336, %337 : vector<2x1xf32>
    %cst_81 = arith.constant 1.000000e+00 : f32
    %339 = vector.broadcast %cst_81 : f32 to vector<2x1xf32>
    %340 = arith.subf %339, %286 : vector<2x1xf32>
    %341 = arith.mulf %338, %340 : vector<2x1xf32>
    %342 = vector.broadcast %306 : vector<1x1xf32> to vector<2x1xf32>
    %343 = arith.mulf %342, %341 : vector<2x1xf32>
    %344 = arith.addf %286, %343 : vector<2x1xf32>
    %cst_82 = arith.constant 1.000000e+00 : f32
    %345 = vector.broadcast %cst_82 : f32 to vector<2x1xf32>
    %346 = arith.subf %345, %344 : vector<2x1xf32>
    %347 = vector.broadcast %306 : vector<1x1xf32> to vector<2x1xf32>
    %348 = arith.mulf %347, %346 : vector<2x1xf32>
    %349 = arith.addf %291, %348 : vector<2x1xf32>
    %350 = vector.broadcast %306 : vector<1x1xf32> to vector<2x1xf32>
    %351 = arith.addf %293, %350 : vector<2x1xf32>
    %352 = vector.broadcast %306 : vector<1x1xf32> to vector<2x32xf32>
    %353 = arith.mulf %352, %325 : vector<2x32xf32>
    %354 = arith.addf %296, %353 : vector<2x32xf32>
    %355 = vector.shape_cast %344 : vector<2x1xf32> to vector<1x2x1xf32>
    %cst_83 = arith.constant dense<0x7F800000> : vector<1xf32>
    %356 = vector.multi_reduction <minimumf>, %355, %cst_83 [1, 2] : vector<1x2x1xf32> to vector<1xf32>
    %357 = vector.shape_cast %356 : vector<1xf32> to vector<1x1x1xf32>
    %358 = vector.extract %357[0, 0, 0] : f32 from vector<1x1x1xf32>
    %359 = vector.broadcast %358 : f32 to vector<1x1xf32>
    %cst_84 = arith.constant 9.900000e-01 : f32
    %360 = vector.broadcast %cst_84 : f32 to vector<1x1xf32>
    %361 = arith.cmpf ole, %359, %360 : vector<1x1xf32>
    %362 = arith.extui %361 : vector<1x1xi1> to vector<1x1xi32>
    %363 = arith.sitofp %362 : vector<1x1xi32> to vector<1x1xf32>
    %364 = arith.mulf %306, %363 : vector<1x1xf32>
    %c6_i32 = arith.constant 6 : i32
    %cst_85 = arith.constant dense<0.000000e+00> : vector<2x128xf32>
    %365 = tpu.matmul %325, %2, %cst_85 {dimension_numbers = #tpu.dot_dimension_numbers<[1], [0], [0], [1], [0, 0, 1, 1], [], []>} : vector<2x32xf32>, vector<32x128xf32>, vector<2x128xf32> -> vector<2x128xf32>
    %366 = arith.addf %9, %365 : vector<2x128xf32>
    %cst_86 = arith.constant 5.000000e-01 : f32
    %367 = vector.broadcast %cst_86 : f32 to vector<2x128xf32>
    %368 = arith.mulf %367, %366 : vector<2x128xf32>
    %369 = math.tanh %368 : vector<2x128xf32>
    %cst_87 = arith.constant 5.000000e-01 : f32
    %370 = vector.broadcast %cst_87 : f32 to vector<2x128xf32>
    %371 = arith.mulf %370, %369 : vector<2x128xf32>
    %cst_88 = arith.constant 5.000000e-01 : f32
    %372 = vector.broadcast %cst_88 : f32 to vector<2x128xf32>
    %373 = arith.addf %371, %372 : vector<2x128xf32>
    %374 = math.tanh %366 : vector<2x128xf32>
    %375 = vector.extract_strided_slice %373 {offsets = [0, 0], sizes = [2, 32], strides = [1, 1]} : vector<2x128xf32> to vector<2x32xf32>
    %376 = vector.extract_strided_slice %373 {offsets = [0, 32], sizes = [2, 32], strides = [1, 1]} : vector<2x128xf32> to vector<2x32xf32>
    %377 = vector.extract_strided_slice %374 {offsets = [0, 64], sizes = [2, 32], strides = [1, 1]} : vector<2x128xf32> to vector<2x32xf32>
    %378 = vector.extract_strided_slice %373 {offsets = [0, 96], sizes = [2, 32], strides = [1, 1]} : vector<2x128xf32> to vector<2x32xf32>
    %379 = arith.mulf %376, %323 : vector<2x32xf32>
    %380 = arith.mulf %375, %377 : vector<2x32xf32>
    %381 = arith.addf %379, %380 : vector<2x32xf32>
    %382 = math.tanh %381 : vector<2x32xf32>
    %383 = arith.mulf %378, %382 : vector<2x32xf32>
    %384 = vector.broadcast %5 : vector<1x32xf32> to vector<2x32xf32>
    %385 = arith.mulf %383, %384 : vector<2x32xf32>
    %cst_89 = arith.constant dense<0.000000e+00> : vector<2xf32>
    %386 = vector.multi_reduction <add>, %385, %cst_89 [1] : vector<2x32xf32> to vector<2xf32>
    %387 = vector.shape_cast %386 : vector<2xf32> to vector<2x1xf32>
    %388 = vector.broadcast %6 : vector<1x1xf32> to vector<2x1xf32>
    %389 = arith.addf %387, %388 : vector<2x1xf32>
    %cst_90 = arith.constant 5.000000e-01 : f32
    %390 = vector.broadcast %cst_90 : f32 to vector<2x1xf32>
    %391 = arith.mulf %390, %389 : vector<2x1xf32>
    %392 = math.tanh %391 : vector<2x1xf32>
    %cst_91 = arith.constant 5.000000e-01 : f32
    %393 = vector.broadcast %cst_91 : f32 to vector<2x1xf32>
    %394 = arith.mulf %393, %392 : vector<2x1xf32>
    %cst_92 = arith.constant 5.000000e-01 : f32
    %395 = vector.broadcast %cst_92 : f32 to vector<2x1xf32>
    %396 = arith.addf %394, %395 : vector<2x1xf32>
    %cst_93 = arith.constant 1.000000e+00 : f32
    %397 = vector.broadcast %cst_93 : f32 to vector<2x1xf32>
    %398 = arith.subf %397, %344 : vector<2x1xf32>
    %399 = arith.mulf %396, %398 : vector<2x1xf32>
    %400 = vector.broadcast %364 : vector<1x1xf32> to vector<2x1xf32>
    %401 = arith.mulf %400, %399 : vector<2x1xf32>
    %402 = arith.addf %344, %401 : vector<2x1xf32>
    %cst_94 = arith.constant 1.000000e+00 : f32
    %403 = vector.broadcast %cst_94 : f32 to vector<2x1xf32>
    %404 = arith.subf %403, %402 : vector<2x1xf32>
    %405 = vector.broadcast %364 : vector<1x1xf32> to vector<2x1xf32>
    %406 = arith.mulf %405, %404 : vector<2x1xf32>
    %407 = arith.addf %349, %406 : vector<2x1xf32>
    %408 = vector.broadcast %364 : vector<1x1xf32> to vector<2x1xf32>
    %409 = arith.addf %351, %408 : vector<2x1xf32>
    %410 = vector.broadcast %364 : vector<1x1xf32> to vector<2x32xf32>
    %411 = arith.mulf %410, %383 : vector<2x32xf32>
    %412 = arith.addf %354, %411 : vector<2x32xf32>
    %413 = vector.shape_cast %402 : vector<2x1xf32> to vector<1x2x1xf32>
    %cst_95 = arith.constant dense<0x7F800000> : vector<1xf32>
    %414 = vector.multi_reduction <minimumf>, %413, %cst_95 [1, 2] : vector<1x2x1xf32> to vector<1xf32>
    %415 = vector.shape_cast %414 : vector<1xf32> to vector<1x1x1xf32>
    %416 = vector.extract %415[0, 0, 0] : f32 from vector<1x1x1xf32>
    %417 = vector.broadcast %416 : f32 to vector<1x1xf32>
    %cst_96 = arith.constant 9.900000e-01 : f32
    %418 = vector.broadcast %cst_96 : f32 to vector<1x1xf32>
    %419 = arith.cmpf ole, %417, %418 : vector<1x1xf32>
    %420 = arith.extui %419 : vector<1x1xi1> to vector<1x1xi32>
    %421 = arith.sitofp %420 : vector<1x1xi32> to vector<1x1xf32>
    %422 = arith.mulf %364, %421 : vector<1x1xf32>
    %c7_i32 = arith.constant 7 : i32
    %cst_97 = arith.constant dense<0.000000e+00> : vector<2x128xf32>
    %423 = tpu.matmul %383, %2, %cst_97 {dimension_numbers = #tpu.dot_dimension_numbers<[1], [0], [0], [1], [0, 0, 1, 1], [], []>} : vector<2x32xf32>, vector<32x128xf32>, vector<2x128xf32> -> vector<2x128xf32>
    %424 = arith.addf %9, %423 : vector<2x128xf32>
    %cst_98 = arith.constant 5.000000e-01 : f32
    %425 = vector.broadcast %cst_98 : f32 to vector<2x128xf32>
    %426 = arith.mulf %425, %424 : vector<2x128xf32>
    %427 = math.tanh %426 : vector<2x128xf32>
    %cst_99 = arith.constant 5.000000e-01 : f32
    %428 = vector.broadcast %cst_99 : f32 to vector<2x128xf32>
    %429 = arith.mulf %428, %427 : vector<2x128xf32>
    %cst_100 = arith.constant 5.000000e-01 : f32
    %430 = vector.broadcast %cst_100 : f32 to vector<2x128xf32>
    %431 = arith.addf %429, %430 : vector<2x128xf32>
    %432 = math.tanh %424 : vector<2x128xf32>
    %433 = vector.extract_strided_slice %431 {offsets = [0, 0], sizes = [2, 32], strides = [1, 1]} : vector<2x128xf32> to vector<2x32xf32>
    %434 = vector.extract_strided_slice %431 {offsets = [0, 32], sizes = [2, 32], strides = [1, 1]} : vector<2x128xf32> to vector<2x32xf32>
    %435 = vector.extract_strided_slice %432 {offsets = [0, 64], sizes = [2, 32], strides = [1, 1]} : vector<2x128xf32> to vector<2x32xf32>
    %436 = vector.extract_strided_slice %431 {offsets = [0, 96], sizes = [2, 32], strides = [1, 1]} : vector<2x128xf32> to vector<2x32xf32>
    %437 = arith.mulf %434, %381 : vector<2x32xf32>
    %438 = arith.mulf %433, %435 : vector<2x32xf32>
    %439 = arith.addf %437, %438 : vector<2x32xf32>
    %440 = math.tanh %439 : vector<2x32xf32>
    %441 = arith.mulf %436, %440 : vector<2x32xf32>
    %442 = vector.broadcast %5 : vector<1x32xf32> to vector<2x32xf32>
    %443 = arith.mulf %441, %442 : vector<2x32xf32>
    %cst_101 = arith.constant dense<0.000000e+00> : vector<2xf32>
    %444 = vector.multi_reduction <add>, %443, %cst_101 [1] : vector<2x32xf32> to vector<2xf32>
    %445 = vector.shape_cast %444 : vector<2xf32> to vector<2x1xf32>
    %446 = vector.broadcast %6 : vector<1x1xf32> to vector<2x1xf32>
    %447 = arith.addf %445, %446 : vector<2x1xf32>
    %cst_102 = arith.constant 5.000000e-01 : f32
    %448 = vector.broadcast %cst_102 : f32 to vector<2x1xf32>
    %449 = arith.mulf %448, %447 : vector<2x1xf32>
    %450 = math.tanh %449 : vector<2x1xf32>
    %cst_103 = arith.constant 5.000000e-01 : f32
    %451 = vector.broadcast %cst_103 : f32 to vector<2x1xf32>
    %452 = arith.mulf %451, %450 : vector<2x1xf32>
    %cst_104 = arith.constant 5.000000e-01 : f32
    %453 = vector.broadcast %cst_104 : f32 to vector<2x1xf32>
    %454 = arith.addf %452, %453 : vector<2x1xf32>
    %cst_105 = arith.constant 1.000000e+00 : f32
    %455 = vector.broadcast %cst_105 : f32 to vector<2x1xf32>
    %456 = arith.subf %455, %402 : vector<2x1xf32>
    %457 = arith.mulf %454, %456 : vector<2x1xf32>
    %458 = vector.broadcast %422 : vector<1x1xf32> to vector<2x1xf32>
    %459 = arith.mulf %458, %457 : vector<2x1xf32>
    %460 = arith.addf %402, %459 : vector<2x1xf32>
    %cst_106 = arith.constant 1.000000e+00 : f32
    %461 = vector.broadcast %cst_106 : f32 to vector<2x1xf32>
    %462 = arith.subf %461, %460 : vector<2x1xf32>
    %463 = vector.broadcast %422 : vector<1x1xf32> to vector<2x1xf32>
    %464 = arith.mulf %463, %462 : vector<2x1xf32>
    %465 = arith.addf %407, %464 : vector<2x1xf32>
    %466 = vector.broadcast %422 : vector<1x1xf32> to vector<2x1xf32>
    %467 = arith.addf %409, %466 : vector<2x1xf32>
    %468 = vector.broadcast %422 : vector<1x1xf32> to vector<2x32xf32>
    %469 = arith.mulf %468, %441 : vector<2x32xf32>
    %470 = arith.addf %412, %469 : vector<2x32xf32>
    %471 = vector.shape_cast %460 : vector<2x1xf32> to vector<1x2x1xf32>
    %cst_107 = arith.constant dense<0x7F800000> : vector<1xf32>
    %472 = vector.multi_reduction <minimumf>, %471, %cst_107 [1, 2] : vector<1x2x1xf32> to vector<1xf32>
    %473 = vector.shape_cast %472 : vector<1xf32> to vector<1x1x1xf32>
    %474 = vector.extract %473[0, 0, 0] : f32 from vector<1x1x1xf32>
    %475 = vector.broadcast %474 : f32 to vector<1x1xf32>
    %cst_108 = arith.constant 9.900000e-01 : f32
    %476 = vector.broadcast %cst_108 : f32 to vector<1x1xf32>
    %477 = arith.cmpf ole, %475, %476 : vector<1x1xf32>
    %478 = arith.extui %477 : vector<1x1xi1> to vector<1x1xi32>
    %479 = arith.sitofp %478 : vector<1x1xi32> to vector<1x1xf32>
    %480 = arith.mulf %422, %479 : vector<1x1xf32>
    %481 = vector.broadcast %465 : vector<2x1xf32> to vector<2x32xf32>
    %482 = arith.mulf %470, %481 : vector<2x32xf32>
    %483 = vector.broadcast %467 : vector<2x1xf32> to vector<2x32xf32>
    %484 = arith.divf %482, %483 : vector<2x32xf32>
    %cst_109 = arith.constant 0.000000e+00 : f32
    %485 = vector.broadcast %cst_109 : f32 to vector<2x128xf32>
    %c0_110 = arith.constant 0 : index
    %c0_111 = arith.constant 0 : index
    %486 = vector.load %arg3[%c0_110, %c0_111] : memref<2x128xf32, #tpu.memory_space<vmem>>, vector<2x128xf32>
    tpu.vector_store %arg3[%c0_110, %c0_111], %485 {strides = array<i32>} : memref<2x128xf32, #tpu.memory_space<vmem>>, vector<2x128xf32>,
    %c0_112 = arith.constant 0 : index
    %c0_113 = arith.constant 0 : index
    %487 = vector.load %arg3[%c0_112, %c0_113] : memref<2x128xf32, #tpu.memory_space<vmem>>, vector<2x32xf32>
    tpu.vector_store %arg3[%c0_112, %c0_113], %484 {strides = array<i32>} : memref<2x128xf32, #tpu.memory_space<vmem>>, vector<2x32xf32>,
    %c0_114 = arith.constant 0 : index
    %c32 = arith.constant 32 : index
    %488 = vector.load %arg3[%c0_114, %c32] : memref<2x128xf32, #tpu.memory_space<vmem>>, vector<2x1xf32>
    tpu.vector_store %arg3[%c0_114, %c32], %460 {strides = array<i32>} : memref<2x128xf32, #tpu.memory_space<vmem>>, vector<2x1xf32>,
    %c0_115 = arith.constant 0 : index
    %c33 = arith.constant 33 : index
    %489 = vector.load %arg3[%c0_115, %c33] : memref<2x128xf32, #tpu.memory_space<vmem>>, vector<2x1xf32>
    tpu.vector_store %arg3[%c0_115, %c33], %467 {strides = array<i32>} : memref<2x128xf32, #tpu.memory_space<vmem>>, vector<2x1xf32>,
    return
  }
  func.func @transform_0(%arg0: i32) -> (i32, i32) {
    %c0_i32 = arith.constant 0 : i32
    %c0_i32_0 = arith.constant 0 : i32
    %c0_i32_1 = arith.constant 0 : i32
    return %c0_i32, %c0_i32_0 : i32, i32
  }
  func.func @transform_1(%arg0: i32) -> (i32, i32) {
    %c0_i32 = arith.constant 0 : i32
    %c0_i32_0 = arith.constant 0 : i32
    %c0_i32_1 = arith.constant 0 : i32
    return %c0_i32, %c0_i32_0 : i32, i32
  }
  func.func @transform_2(%arg0: i32) -> (i32, i32) {
    %c0_i32 = arith.constant 0 : i32
    %c0_i32_0 = arith.constant 0 : i32
    %c0_i32_1 = arith.constant 0 : i32
    return %c0_i32, %c0_i32_0 : i32, i32
  }
}

</mosaic_0001>

<llo_original>
// kernel: tpu_custom_call.1
$region0: #{tpu_custom_call.1}
  #allocation0 [shape = 'u32[]', space=smem, size = 0x4, offset = 0x4, fixed_abs, tag = 'smem constant byte address 0x4 - core index']
  #allocation1 [shape = 'u32[144,128]{1,0:T(1,128)}', space=vmem, size = 0x12000, scoped, tag = 'internal scratch']
  %s0 = inlined_call_operand.hbm [shape: f32[2,16], index: 0, kind: input, shape index: {}]
  %s1 = inlined_call_operand.hbm [shape: f32[56,128], index: 1, kind: input, shape index: {}]
  %s2 = inlined_call_operand.hbm [shape: f32[2,128], index: 2, kind: output, shape index: {}]
  %s3 = sld [smem:[#allocation0]]
  $region26: #{tpu_custom_call.1} parent=0
    _
  %s5 = ssub.s32 1, %s3
  %s6 = scalar_select 0, %s5, %s3
  $region1: #{tpu_custom_call.1} parent=0
    #allocation2 [shape = 'u8[1024]{0}', space=vmem, size = 0x400, scoped, tag = 'input window, operand 0, single buffered']
    #allocation3 [shape = 's32[1]{0}', space=sflag, size = 0x4, scoped, tag = 'scoped memory for tpu_custom_call.1']
    #allocation4 [shape = 's32[1]{0}', space=sflag, size = 0x4, scoped, tag = 'scoped memory for tpu_custom_call.1']
    #allocation5 [shape = 'u8[28672]{0}', space=vmem, size = 0x7000, scoped, tag = 'input window, operand 1, single buffered']
    #allocation6 [shape = 's32[1]{0}', space=sflag, size = 0x4, scoped, tag = 'scoped memory for tpu_custom_call.1']
    #allocation7 [shape = 'u8[1024]{0}', space=vmem, size = 0x400, scoped, tag = 'output window, operand 0, single buffered']
    %7 = vsyncpa [#allocation3], 0
    %8 = vsyncpa [#allocation6], 0
    %9 = vsyncpa [#allocation4], 0
    // Predicated region
    $region2: #{tpu_custom_call.1} parent=1 // pred_check
      _
    $region3: #{tpu_custom_call.1} parent=1 // pred_check_branch
      %11 = sbr.rel (0) target = $region5
    $region4: #{tpu_custom_call.1} parent=1 // pred_region
      %s13 = ssub.s32 32, 32
      %14 = vsyncadd [#allocation3], %s13
      %s16 = sshll.u32 [#allocation2], 4
      %s17 = int_to_ptr.vmem [resolvable:$true] %s16
      %19 = dma.hbm_to_vmem [thread:$0]  %s0, 32, %s17, [#allocation3]
    $region5: #{tpu_custom_call.1} parent=1 // pred_fallthru
      _
    // Predicated region
    $region6: #{tpu_custom_call.1} parent=1 // pred_check
      _
    $region7: #{tpu_custom_call.1} parent=1 // pred_check_branch
      %21 = sbr.rel (0) target = $region9
    $region8: #{tpu_custom_call.1} parent=1 // pred_region
      %s23 = ssub.s32 896, 896
      %24 = vsyncadd [#allocation6], %s23
      %s25 = sshll.u32 [#allocation5], 4
      %s26 = int_to_ptr.vmem [resolvable:$true] %s25
      %31 = dma.hbm_to_vmem [thread:$0]  %s1, 896, %s26, [#allocation6], 128, 128, 8
    $region9: #{tpu_custom_call.1} parent=1 // pred_fallthru
      _
    // Predicated region
    $region10: #{tpu_custom_call.1} parent=1 // pred_check
      _
    $region11: #{tpu_custom_call.1} parent=1 // pred_check_branch
      %33 = sbr.rel (0) target = $region13
    $region12: #{tpu_custom_call.1} parent=1 // pred_region
      %34 = dma.done [#allocation3], 32
    $region13: #{tpu_custom_call.1} parent=1 // pred_fallthru
      _
    // Predicated region
    $region14: #{tpu_custom_call.1} parent=1 // pred_check
      _
    $region15: #{tpu_custom_call.1} parent=1 // pred_check_branch
      %36 = sbr.rel (0) target = $region17
    $region16: #{tpu_custom_call.1} parent=1 // pred_region
      %37 = dma.done [#allocation6], 896
    $region17: #{tpu_custom_call.1} parent=1 // pred_fallthru
      _
    %v38 = vld [vmem:[#allocation2] sm:$0x3]
    %v39 = vld [vmem:[#allocation5] sm:$0xff]
    %v40 = vld [vmem:[#allocation5 + $0x8] sm:$0xff]
    %v41 = vld [vmem:[#allocation5 + $0x10] sm:$0xff]
    %v42 = vld [vmem:[#allocation5 + $0x18] sm:$0xff]
    %v43 = vld [vmem:[#allocation5 + $0x20] sm:$0xff]
    %v44 = vld [vmem:[#allocation5 + $0x28] sm:$0xff]
    %v45 = vld [vmem:[#allocation5 + $0x30] sm:$0x1]
    %v46 = vld [vmem:[#allocation5 + $0x31] sm:$0x1]
    %v47 = vlaneseq
    %v48 = vshrl.u32 %v47, 7
    %v49 = vsub.s32 0, %v48
    %v50 = vrot.slane %v45, %v49
    %vm51 = vcmask 130048
    %v53 = vsel %vm51, %v38, 0
    %55 = vmatprep.subr.mxu0 0.0
    %56 = vmatpush1.msra.mxu0 %v39
    %57 = vmatprep.subr.mxu0 0.0
    %58 = vmatpush1.msra.mxu0 %v40
    %59 = vmatprep.subr.mxu0 0.0
    %60 = vmatpush1.msra.mxu0 0.0
    %61 = vmatprep.subr.mxu0 0.0
    %62 = vmatpush1.msra.mxu0 0.0
    %63 = vmatprep.subr.mxu0 0.0
    %64 = vmatpush1.msra.mxu0 0.0
    %65 = vmatprep.subr.mxu0 0.0
    %66 = vmatpush1.msra.mxu0 0.0
    %67 = vmatprep.subr.mxu0 0.0
    %68 = vmatpush1.msra.mxu0 0.0
    %69 = vmatprep.subr.mxu0 0.0
    %70 = vmatpush1.msra.mxu0 0.0
    %71 = vmatprep.subr.mxu0 0.0
    %72 = vmatpush1.msra.mxu0 0.0
    %73 = vmatprep.subr.mxu0 0.0
    %74 = vmatpush1.msra.mxu0 0.0
    %75 = vmatprep.subr.mxu0 0.0
    %76 = vmatpush1.msra.mxu0 0.0
    %77 = vmatprep.subr.mxu0 0.0
    %78 = vmatpush1.msra.mxu0 0.0
    %79 = vmatprep.subr.mxu0 0.0
    %80 = vmatpush1.msra.mxu0 0.0
    %81 = vmatprep.subr.mxu0 0.0
    %82 = vmatpush1.msra.mxu0 0.0
    %83 = vmatprep.subr.mxu0 0.0
    %84 = vmatpush1.msra.mxu0 0.0
    %85 = vmatprep.subr.mxu0 0.0
    %86 = vmatpush1.msra.mxu0 0.0
    %87 = vmatprep.subr.mxu0 0.0
    %88 = vmatpush1.msra.mxu0 0.0
    %89 = vmatprep.subr.mxu0 0.0
    %90 = vmatpush1.msra.mxu0 0.0
    %91 = vmatprep.subr.mxu0 0.0
    %92 = vmatpush1.msra.mxu0 0.0
    %93 = vmatprep.subr.mxu0 0.0
    %94 = vmatpush1.msra.mxu0 0.0
    %95 = vmatprep.subr.mxu0 0.0
    %96 = vmatpush1.msra.mxu0 0.0
    %97 = vmatprep.subr.mxu0 0.0
    %98 = vmatpush1.msra.mxu0 0.0
    %99 = vmatprep.subr.mxu0 0.0
    %100 = vmatpush1.msra.mxu0 0.0
    %101 = vmatprep.subr.mxu0 0.0
    %102 = vmatpush1.msra.mxu0 0.0
    %103 = vmatprep.subr.mxu0 0.0
    %104 = vmatpush1.msra.mxu0 0.0
    %105 = vmatprep.subr.mxu0 0.0
    %106 = vmatpush1.msra.mxu0 0.0
    %107 = vmatprep.subr.mxu0 0.0
    %108 = vmatpush1.msra.mxu0 0.0
    %109 = vmatprep.subr.mxu0 0.0
    %110 = vmatpush1.msra.mxu0 0.0
    %111 = vmatprep.subr.mxu0 0.0
    %112 = vmatpush1.msra.mxu0 0.0
    %113 = vmatprep.subr.mxu0 0.0
    %114 = vmatpush1.msra.mxu0 0.0
    %115 = vmatprep.subr.mxu0 0.0
    %116 = vmatpush1.msra.mxu0 0.0
    %117 = vmatprep.subr.mxu0 0.0
    %118 = vmatpush1.msra.mxu0 0.0
    %119 = vmatprep.mubr.f32.mxu0 0.0
    %120 = vmatmul.mubr.f32.gmra.mrb[0].mxu0 %v53
    %v121 = vpop.f32.mrb[0].mxu0
    %v122 = vadd.f32 %v50, %v121
    %v123 = vpop.f32.mrb[0].mxu0
    %124 = vdwg.mxu0
    %vm125 = vcmask 261120
    %v127 = vsel %vm125, 0.0, 0
    %129 = vmatprep.subr.mxu0 0.0
    %130 = vmatpush1.msra.mxu0 %v41
    %131 = vmatprep.subr.mxu0 0.0
    %132 = vmatpush1.msra.mxu0 %v42
    %133 = vmatprep.subr.mxu0 0.0
    %134 = vmatpush1.msra.mxu0 %v43
    %135 = vmatprep.subr.mxu0 0.0
    %136 = vmatpush1.msra.mxu0 %v44
    %137 = vmatprep.subr.mxu0 0.0
    %138 = vmatpush1.msra.mxu0 0.0
    %139 = vmatprep.subr.mxu0 0.0
    %140 = vmatpush1.msra.mxu0 0.0
    %141 = vmatprep.subr.mxu0 0.0
    %142 = vmatpush1.msra.mxu0 0.0
    %143 = vmatprep.subr.mxu0 0.0
    %144 = vmatpush1.msra.mxu0 0.0
    %145 = vmatprep.subr.mxu0 0.0
    %146 = vmatpush1.msra.mxu0 0.0
    %147 = vmatprep.subr.mxu0 0.0
    %148 = vmatpush1.msra.mxu0 0.0
    %149 = vmatprep.subr.mxu0 0.0
    %150 = vmatpush1.msra.mxu0 0.0
    %151 = vmatprep.subr.mxu0 0.0
    %152 = vmatpush1.msra.mxu0 0.0
    %153 = vmatprep.subr.mxu0 0.0
    %154 = vmatpush1.msra.mxu0 0.0
    %155 = vmatprep.subr.mxu0 0.0
    %156 = vmatpush1.msra.mxu0 0.0
    %157 = vmatprep.subr.mxu0 0.0
    %158 = vmatpush1.msra.mxu0 0.0
    %159 = vmatprep.subr.mxu0 0.0
    %160 = vmatpush1.msra.mxu0 0.0
    %161 = vmatprep.subr.mxu0 0.0
    %162 = vmatpush1.msra.mxu0 0.0
    %163 = vmatprep.subr.mxu0 0.0
    %164 = vmatpush1.msra.mxu0 0.0
    %165 = vmatprep.subr.mxu0 0.0
    %166 = vmatpush1.msra.mxu0 0.0
    %167 = vmatprep.subr.mxu0 0.0
    %168 = vmatpush1.msra.mxu0 0.0
    %169 = vmatprep.subr.mxu0 0.0
    %170 = vmatpush1.msra.mxu0 0.0
    %171 = vmatprep.subr.mxu0 0.0
    %172 = vmatpush1.msra.mxu0 0.0
    %173 = vmatprep.subr.mxu0 0.0
    %174 = vmatpush1.msra.mxu0 0.0
    %175 = vmatprep.subr.mxu0 0.0
    %176 = vmatpush1.msra.mxu0 0.0
    %177 = vmatprep.subr.mxu0 0.0
    %178 = vmatpush1.msra.mxu0 0.0
    %179 = vmatprep.subr.mxu0 0.0
    %180 = vmatpush1.msra.mxu0 0.0
    %181 = vmatprep.subr.mxu0 0.0
    %182 = vmatpush1.msra.mxu0 0.0
    %183 = vmatprep.subr.mxu0 0.0
    %184 = vmatpush1.msra.mxu0 0.0
    %185 = vmatprep.subr.mxu0 0.0
    %186 = vmatpush1.msra.mxu0 0.0
    %187 = vmatprep.subr.mxu0 0.0
    %188 = vmatpush1.msra.mxu0 0.0
    %189 = vmatprep.subr.mxu0 0.0
    %190 = vmatpush1.msra.mxu0 0.0
    %191 = vmatprep.subr.mxu0 0.0
    %192 = vmatpush1.msra.mxu0 0.0
    %193 = vmatprep.mubr.f32.mxu0 0.0
    %194 = vmatmul.mubr.f32.gmra.mrb[0].mxu0 %v127
    %v195 = vpop.f32.mrb[0].mxu0
    %v196 = vadd.f32 0.0, %v195
    %v197 = vpop.f32.mrb[0].mxu0
    %198 = vdwg.mxu0
    %v199 = vadd.f32 %v122, %v196
    %v200 = vmul.f32 %v199, 0.5
    %v201 = vtanh.pop %v200
    %v202 = vmul.f32 %v201, 0.5
    %v203 = vadd.f32 %v202, 0.5
    %v204 = vtanh.pop %v199
    %v205 = vmul.f32 %v203, 0.0
    %207 = vrot.lane.b32.xlu0 %v204, 64
    %v208 = vpop.permute.xlu0 %207
    %v210 = vmul.f32 %v203, %v208
    %212 = vrot.lane.b32.xlu0 %v210, 32
    %v213 = vpop.permute.xlu0 %212
    %v215 = vadd.f32 %v205, %v213
    %v216 = vtanh.pop %v215
    %218 = vrot.lane.b32.xlu0 %v216, 64
    %v219 = vpop.permute.xlu0 %218
    %v221 = vmul.f32 %v203, %v219
    %v222 = vlaneseq
    %v223 = vshrl.u32 %v222, 7
    %v224 = vsub.s32 0, %v223
    %v225 = vrot.slane %v46, %v224
    %227 = vrot.lane.b32.xlu0 %v225, 96
    %v228 = vpop.permute.xlu0 %227
    %v230 = vmul.f32 %v221, %v228
    %232 = vrot.lane.b32.xlu0 %v230, 32
    %v233 = vpop.permute.xlu0 %232
    %vm235 = vcmask 254976
    %v236 = vsel %vm235, %v233, 0.0
    %237 = vadd.xlane.f32.xlu0 %v236
    %v238 = vpop.xlane.xlu0 %237
    %v239 = vadd.f32 %v238, %v225
    %v240 = vmul.f32 %v239, 0.5
    %v241 = vtanh.pop %v240
    %v242 = vmul.f32 %v241, 0.5
    %v243 = vadd.f32 %v242, 0.5
    %v244 = vadd.f32 %v243, 0.0
    %v245 = vsub.f32 1.0, %v244
    %v246 = vadd.f32 %v245, 0.0
    %v247 = vadd.f32 %v221, 0.0
    %vm248 = vcmask 263424
    %v249 = vsel %vm248, %v244, inf
    %250 = vmin.xlane.f32.xlu0 %v249
    %v251 = vpop.xlane.xlu0 %250
    %v252 = vrot.slane %v251, 4
    %v253 = vmin.f32 %v251, %v252
    %v254 = vrot.slane %v253, 2
    %v255 = vmin.f32 %v253, %v254
    %v256 = vrot.slane %v255, 1
    %v257 = vmin.f32 %v255, %v256
    %s258 = vtos %v257
    %v259 = vstv %s258
    %vm260 = vcmp.le.f32.partialorder %v259, 0.99
    %v261 = vsel %vm260, 1, 0
    %v262 = vcvt.s32.f32 %v261
    %264 = vrot.lane.b32.xlu0 %v221, 32
    %v265 = vpop.permute.xlu0 %264
    %v266 = vsel %vm125, %v265, 0
    %268 = vmatprep.subr.mxu0 0.0
    %269 = vmatpush1.msra.mxu0 %v41
    %270 = vmatprep.subr.mxu0 0.0
    %271 = vmatpush1.msra.mxu0 %v42
    %272 = vmatprep.subr.mxu0 0.0
    %273 = vmatpush1.msra.mxu0 %v43
    %274 = vmatprep.subr.mxu0 0.0
    %275 = vmatpush1.msra.mxu0 %v44
    %276 = vmatprep.subr.mxu0 0.0
    %277 = vmatpush1.msra.mxu0 0.0
    %278 = vmatprep.subr.mxu0 0.0
    %279 = vmatpush1.msra.mxu0 0.0
    %280 = vmatprep.subr.mxu0 0.0
    %281 = vmatpush1.msra.mxu0 0.0
    %282 = vmatprep.subr.mxu0 0.0
    %283 = vmatpush1.msra.mxu0 0.0
    %284 = vmatprep.subr.mxu0 0.0
    %285 = vmatpush1.msra.mxu0 0.0
    %286 = vmatprep.subr.mxu0 0.0
    %287 = vmatpush1.msra.mxu0 0.0
    %288 = vmatprep.subr.mxu0 0.0
    %289 = vmatpush1.msra.mxu0 0.0
    %290 = vmatprep.subr.mxu0 0.0
    %291 = vmatpush1.msra.mxu0 0.0
    %292 = vmatprep.subr.mxu0 0.0
    %293 = vmatpush1.msra.mxu0 0.0
    %294 = vmatprep.subr.mxu0 0.0
    %295 = vmatpush1.msra.mxu0 0.0
    %296 = vmatprep.subr.mxu0 0.0
    %297 = vmatpush1.msra.mxu0 0.0
    %298 = vmatprep.subr.mxu0 0.0
    %299 = vmatpush1.msra.mxu0 0.0
    %300 = vmatprep.subr.mxu0 0.0
    %301 = vmatpush1.msra.mxu0 0.0
    %302 = vmatprep.subr.mxu0 0.0
    %303 = vmatpush1.msra.mxu0 0.0
    %304 = vmatprep.subr.mxu0 0.0
    %305 = vmatpush1.msra.mxu0 0.0
    %306 = vmatprep.subr.mxu0 0.0
    %307 = vmatpush1.msra.mxu0 0.0
    %308 = vmatprep.subr.mxu0 0.0
    %309 = vmatpush1.msra.mxu0 0.0
    %310 = vmatprep.subr.mxu0 0.0
    %311 = vmatpush1.msra.mxu0 0.0
    %312 = vmatprep.subr.mxu0 0.0
    %313 = vmatpush1.msra.mxu0 0.0
    %314 = vmatprep.subr.mxu0 0.0
    %315 = vmatpush1.msra.mxu0 0.0
    %316 = vmatprep.subr.mxu0 0.0
    %317 = vmatpush1.msra.mxu0 0.0
    %318 = vmatprep.subr.mxu0 0.0
    %319 = vmatpush1.msra.mxu0 0.0
    %320 = vmatprep.subr.mxu0 0.0
    %321 = vmatpush1.msra.mxu0 0.0
    %322 = vmatprep.subr.mxu0 0.0
    %323 = vmatpush1.msra.mxu0 0.0
    %324 = vmatprep.subr.mxu0 0.0
    %325 = vmatpush1.msra.mxu0 0.0
    %326 = vmatprep.subr.mxu0 0.0
    %327 = vmatpush1.msra.mxu0 0.0
    %328 = vmatprep.subr.mxu0 0.0
    %329 = vmatpush1.msra.mxu0 0.0
    %330 = vmatprep.subr.mxu0 0.0
    %331 = vmatpush1.msra.mxu0 0.0
    %332 = vmatprep.mubr.f32.mxu0 0.0
    %333 = vmatmul.mubr.f32.gmra.mrb[0].mxu0 %v266
    %v334 = vpop.f32.mrb[0].mxu0
    %v335 = vadd.f32 0.0, %v334
    %v336 = vpop.f32.mrb[0].mxu0
    %337 = vdwg.mxu0
    %v338 = vadd.f32 %v122, %v335
    %v339 = vmul.f32 %v338, 0.5
    %v340 = vtanh.pop %v339
    %v341 = vmul.f32 %v340, 0.5
    %v342 = vadd.f32 %v341, 0.5
    %v343 = vtanh.pop %v338
    %v344 = vmul.f32 %v342, %v215
    %346 = vrot.lane.b32.xlu0 %v343, 64
    %v347 = vpop.permute.xlu0 %346
    %v349 = vmul.f32 %v342, %v347
    %351 = vrot.lane.b32.xlu0 %v349, 32
    %v352 = vpop.permute.xlu0 %351
    %v354 = vadd.f32 %v344, %v352
    %v355 = vtanh.pop %v354
    %357 = vrot.lane.b32.xlu0 %v355, 64
    %v358 = vpop.permute.xlu0 %357
    %v360 = vmul.f32 %v342, %v358
    %v361 = vmul.f32 %v360, %v228
    %363 = vrot.lane.b32.xlu0 %v361, 32
    %v364 = vpop.permute.xlu0 %363
    %v366 = vsel %vm235, %v364, 0.0
    %367 = vadd.xlane.f32.xlu0 %v366
    %v368 = vpop.xlane.xlu0 %367
    %v369 = vadd.f32 %v368, %v225
    %v370 = vmul.f32 %v369, 0.5
    %v371 = vtanh.pop %v370
    %v372 = vmul.f32 %v371, 0.5
    %v373 = vadd.f32 %v372, 0.5
    %v374 = vmul.f32 %v373, %v245
    %v375 = vmul.f32 %v262, %v374
    %v376 = vadd.f32 %v244, %v375
    %v377 = vsub.f32 1.0, %v376
    %v378 = vmul.f32 %v262, %v377
    %v379 = vadd.f32 %v246, %v378
    %v380 = vadd.f32 %v262, 1.0
    %v381 = vmul.f32 %v262, %v360
    %v382 = vadd.f32 %v247, %v381
    %v383 = vsel %vm248, %v376, inf
    %384 = vmin.xlane.f32.xlu0 %v383
    %v385 = vpop.xlane.xlu0 %384
    %v386 = vrot.slane %v385, 4
    %v387 = vmin.f32 %v385, %v386
    %v388 = vrot.slane %v387, 2
    %v389 = vmin.f32 %v387, %v388
    %v390 = vrot.slane %v389, 1
    %v391 = vmin.f32 %v389, %v390
    %s392 = vtos %v391
    %v393 = vstv %s392
    %vm394 = vcmp.le.f32.partialorder %v393, 0.99
    %v395 = vsel %vm394, 1, 0
    %v396 = vcvt.s32.f32 %v395
    %v397 = vmul.f32 %v262, %v396
    %399 = vrot.lane.b32.xlu0 %v360, 32
    %v400 = vpop.permute.xlu0 %399
    %v401 = vsel %vm125, %v400, 0
    %403 = vmatprep.subr.mxu0 0.0
    %404 = vmatpush1.msra.mxu0 %v41
    %405 = vmatprep.subr.mxu0 0.0
    %406 = vmatpush1.msra.mxu0 %v42
    %407 = vmatprep.subr.mxu0 0.0
    %408 = vmatpush1.msra.mxu0 %v43
    %409 = vmatprep.subr.mxu0 0.0
    %410 = vmatpush1.msra.mxu0 %v44
    %411 = vmatprep.subr.mxu0 0.0
    %412 = vmatpush1.msra.mxu0 0.0
    %413 = vmatprep.subr.mxu0 0.0
    %414 = vmatpush1.msra.mxu0 0.0
    %415 = vmatprep.subr.mxu0 0.0
    %416 = vmatpush1.msra.mxu0 0.0
    %417 = vmatprep.subr.mxu0 0.0
    %418 = vmatpush1.msra.mxu0 0.0
    %419 = vmatprep.subr.mxu0 0.0
    %420 = vmatpush1.msra.mxu0 0.0
    %421 = vmatprep.subr.mxu0 0.0
    %422 = vmatpush1.msra.mxu0 0.0
    %423 = vmatprep.subr.mxu0 0.0
    %424 = vmatpush1.msra.mxu0 0.0
    %425 = vmatprep.subr.mxu0 0.0
    %426 = vmatpush1.msra.mxu0 0.0
    %427 = vmatprep.subr.mxu0 0.0
    %428 = vmatpush1.msra.mxu0 0.0
    %429 = vmatprep.subr.mxu0 0.0
    %430 = vmatpush1.msra.mxu0 0.0
    %431 = vmatprep.subr.mxu0 0.0
    %432 = vmatpush1.msra.mxu0 0.0
    %433 = vmatprep.subr.mxu0 0.0
    %434 = vmatpush1.msra.mxu0 0.0
    %435 = vmatprep.subr.mxu0 0.0
    %436 = vmatpush1.msra.mxu0 0.0
    %437 = vmatprep.subr.mxu0 0.0
    %438 = vmatpush1.msra.mxu0 0.0
    %439 = vmatprep.subr.mxu0 0.0
    %440 = vmatpush1.msra.mxu0 0.0
    %441 = vmatprep.subr.mxu0 0.0
    %442 = vmatpush1.msra.mxu0 0.0
    %443 = vmatprep.subr.mxu0 0.0
    %444 = vmatpush1.msra.mxu0 0.0
    %445 = vmatprep.subr.mxu0 0.0
    %446 = vmatpush1.msra.mxu0 0.0
    %447 = vmatprep.subr.mxu0 0.0
    %448 = vmatpush1.msra.mxu0 0.0
    %449 = vmatprep.subr.mxu0 0.0
    %450 = vmatpush1.msra.mxu0 0.0
    %451 = vmatprep.subr.mxu0 0.0
    %452 = vmatpush1.msra.mxu0 0.0
    %453 = vmatprep.subr.mxu0 0.0
    %454 = vmatpush1.msra.mxu0 0.0
    %455 = vmatprep.subr.mxu0 0.0
    %456 = vmatpush1.msra.mxu0 0.0
    %457 = vmatprep.subr.mxu0 0.0
    %458 = vmatpush1.msra.mxu0 0.0
    %459 = vmatprep.subr.mxu0 0.0
    %460 = vmatpush1.msra.mxu0 0.0
    %461 = vmatprep.subr.mxu0 0.0
    %462 = vmatpush1.msra.mxu0 0.0
    %463 = vmatprep.subr.mxu0 0.0
    %464 = vmatpush1.msra.mxu0 0.0
    %465 = vmatprep.subr.mxu0 0.0
    %466 = vmatpush1.msra.mxu0 0.0
    %467 = vmatprep.mubr.f32.mxu0 0.0
    %468 = vmatmul.mubr.f32.gmra.mrb[0].mxu0 %v401
    %v469 = vpop.f32.mrb[0].mxu0
    %v470 = vadd.f32 0.0, %v469
    %v471 = vpop.f32.mrb[0].mxu0
    %472 = vdwg.mxu0
    %v473 = vadd.f32 %v122, %v470
    %v474 = vmul.f32 %v473, 0.5
    %v475 = vtanh.pop %v474
    %v476 = vmul.f32 %v475, 0.5
    %v477 = vadd.f32 %v476, 0.5
    %v478 = vtanh.pop %v473
    %v479 = vmul.f32 %v477, %v354
    %481 = vrot.lane.b32.xlu0 %v478, 64
    %v482 = vpop.permute.xlu0 %481
    %v484 = vmul.f32 %v477, %v482
    %486 = vrot.lane.b32.xlu0 %v484, 32
    %v487 = vpop.permute.xlu0 %486
    %v489 = vadd.f32 %v479, %v487
    %v490 = vtanh.pop %v489
    %492 = vrot.lane.b32.xlu0 %v490, 64
    %v493 = vpop.permute.xlu0 %492
    %v495 = vmul.f32 %v477, %v493
    %v496 = vmul.f32 %v495, %v228
    %498 = vrot.lane.b32.xlu0 %v496, 32
    %v499 = vpop.permute.xlu0 %498
    %v501 = vsel %vm235, %v499, 0.0
    %502 = vadd.xlane.f32.xlu0 %v501
    %v503 = vpop.xlane.xlu0 %502
    %v504 = vadd.f32 %v503, %v225
    %v505 = vmul.f32 %v504, 0.5
    %v506 = vtanh.pop %v505
    %v507 = vmul.f32 %v506, 0.5
    %v508 = vadd.f32 %v507, 0.5
    %v509 = vmul.f32 %v508, %v377
    %v510 = vmul.f32 %v397, %v509
    %v511 = vadd.f32 %v376, %v510
    %v512 = vsub.f32 1.0, %v511
    %v513 = vmul.f32 %v397, %v512
    %v514 = vadd.f32 %v379, %v513
    %v515 = vadd.f32 %v380, %v397
    %v516 = vmul.f32 %v397, %v495
    %v517 = vadd.f32 %v382, %v516
    %v518 = vsel %vm248, %v511, inf
    %519 = vmin.xlane.f32.xlu0 %v518
    %v520 = vpop.xlane.xlu0 %519
    %v521 = vrot.slane %v520, 4
    %v522 = vmin.f32 %v520, %v521
    %v523 = vrot.slane %v522, 2
    %v524 = vmin.f32 %v522, %v523
    %v525 = vrot.slane %v524, 1
    %v526 = vmin.f32 %v524, %v525
    %s527 = vtos %v526
    %v528 = vstv %s527
    %vm529 = vcmp.le.f32.partialorder %v528, 0.99
    %v530 = vsel %vm529, 1, 0
    %v531 = vcvt.s32.f32 %v530
    %v532 = vmul.f32 %v397, %v531
    %534 = vrot.lane.b32.xlu0 %v495, 32
    %v535 = vpop.permute.xlu0 %534
    %v536 = vsel %vm125, %v535, 0
    %538 = vmatprep.subr.mxu0 0.0
    %539 = vmatpush1.msra.mxu0 %v41
    %540 = vmatprep.subr.mxu0 0.0
    %541 = vmatpush1.msra.mxu0 %v42
    %542 = vmatprep.subr.mxu0 0.0
    %543 = vmatpush1.msra.mxu0 %v43
    %544 = vmatprep.subr.mxu0 0.0
    %545 = vmatpush1.msra.mxu0 %v44
    %546 = vmatprep.subr.mxu0 0.0
    %547 = vmatpush1.msra.mxu0 0.0
    %548 = vmatprep.subr.mxu0 0.0
    %549 = vmatpush1.msra.mxu0 0.0
    %550 = vmatprep.subr.mxu0 0.0
    %551 = vmatpush1.msra.mxu0 0.0
    %552 = vmatprep.subr.mxu0 0.0
    %553 = vmatpush1.msra.mxu0 0.0
    %554 = vmatprep.subr.mxu0 0.0
    %555 = vmatpush1.msra.mxu0 0.0
    %556 = vmatprep.subr.mxu0 0.0
    %557 = vmatpush1.msra.mxu0 0.0
    %558 = vmatprep.subr.mxu0 0.0
    %559 = vmatpush1.msra.mxu0 0.0
    %560 = vmatprep.subr.mxu0 0.0
    %561 = vmatpush1.msra.mxu0 0.0
    %562 = vmatprep.subr.mxu0 0.0
    %563 = vmatpush1.msra.mxu0 0.0
    %564 = vmatprep.subr.mxu0 0.0
    %565 = vmatpush1.msra.mxu0 0.0
    %566 = vmatprep.subr.mxu0 0.0
    %567 = vmatpush1.msra.mxu0 0.0
    %568 = vmatprep.subr.mxu0 0.0
    %569 = vmatpush1.msra.mxu0 0.0
    %570 = vmatprep.subr.mxu0 0.0
    %571 = vmatpush1.msra.mxu0 0.0
    %572 = vmatprep.subr.mxu0 0.0
    %573 = vmatpush1.msra.mxu0 0.0
    %574 = vmatprep.subr.mxu0 0.0
    %575 = vmatpush1.msra.mxu0 0.0
    %576 = vmatprep.subr.mxu0 0.0
    %577 = vmatpush1.msra.mxu0 0.0
    %578 = vmatprep.subr.mxu0 0.0
    %579 = vmatpush1.msra.mxu0 0.0
    %580 = vmatprep.subr.mxu0 0.0
    %581 = vmatpush1.msra.mxu0 0.0
    %582 = vmatprep.subr.mxu0 0.0
    %583 = vmatpush1.msra.mxu0 0.0
    %584 = vmatprep.subr.mxu0 0.0
    %585 = vmatpush1.msra.mxu0 0.0
    %586 = vmatprep.subr.mxu0 0.0
    %587 = vmatpush1.msra.mxu0 0.0
    %588 = vmatprep.subr.mxu0 0.0
    %589 = vmatpush1.msra.mxu0 0.0
    %590 = vmatprep.subr.mxu0 0.0
    %591 = vmatpush1.msra.mxu0 0.0
    %592 = vmatprep.subr.mxu0 0.0
    %593 = vmatpush1.msra.mxu0 0.0
    %594 = vmatprep.subr.mxu0 0.0
    %595 = vmatpush1.msra.mxu0 0.0
    %596 = vmatprep.subr.mxu0 0.0
    %597 = vmatpush1.msra.mxu0 0.0
    %598 = vmatprep.subr.mxu0 0.0
    %599 = vmatpush1.msra.mxu0 0.0
    %600 = vmatprep.subr.mxu0 0.0
    %601 = vmatpush1.msra.mxu0 0.0
    %602 = vmatprep.mubr.f32.mxu0 0.0
    %603 = vmatmul.mubr.f32.gmra.mrb[0].mxu0 %v536
    %v604 = vpop.f32.mrb[0].mxu0
    %v605 = vadd.f32 0.0, %v604
    %v606 = vpop.f32.mrb[0].mxu0
    %607 = vdwg.mxu0
    %v608 = vadd.f32 %v122, %v605
    %v609 = vmul.f32 %v608, 0.5
    %v610 = vtanh.pop %v609
    %v611 = vmul.f32 %v610, 0.5
    %v612 = vadd.f32 %v611, 0.5
    %v613 = vtanh.pop %v608
    %v614 = vmul.f32 %v612, %v489
    %616 = vrot.lane.b32.xlu0 %v613, 64
    %v617 = vpop.permute.xlu0 %616
    %v619 = vmul.f32 %v612, %v617
    %621 = vrot.lane.b32.xlu0 %v619, 32
    %v622 = vpop.permute.xlu0 %621
    %v624 = vadd.f32 %v614, %v622
    %v625 = vtanh.pop %v624
    %627 = vrot.lane.b32.xlu0 %v625, 64
    %v628 = vpop.permute.xlu0 %627
    %v630 = vmul.f32 %v612, %v628
    %v631 = vmul.f32 %v630, %v228
    %633 = vrot.lane.b32.xlu0 %v631, 32
    %v634 = vpop.permute.xlu0 %633
    %v636 = vsel %vm235, %v634, 0.0
    %637 = vadd.xlane.f32.xlu0 %v636
    %v638 = vpop.xlane.xlu0 %637
    %v639 = vadd.f32 %v638, %v225
    %v640 = vmul.f32 %v639, 0.5
    %v641 = vtanh.pop %v640
    %v642 = vmul.f32 %v641, 0.5
    %v643 = vadd.f32 %v642, 0.5
    %v644 = vmul.f32 %v643, %v512
    %v645 = vmul.f32 %v532, %v644
    %v646 = vadd.f32 %v511, %v645
    %v647 = vsub.f32 1.0, %v646
    %v648 = vmul.f32 %v532, %v647
    %v649 = vadd.f32 %v514, %v648
    %v650 = vadd.f32 %v515, %v532
    %v651 = vmul.f32 %v532, %v630
    %v652 = vadd.f32 %v517, %v651
    %v653 = vsel %vm248, %v646, inf
    %654 = vmin.xlane.f32.xlu0 %v653
    %v655 = vpop.xlane.xlu0 %654
    %v656 = vrot.slane %v655, 4
    %v657 = vmin.f32 %v655, %v656
    %v658 = vrot.slane %v657, 2
    %v659 = vmin.f32 %v657, %v658
    %v660 = vrot.slane %v659, 1
    %v661 = vmin.f32 %v659, %v660
    %s662 = vtos %v661
    %v663 = vstv %s662
    %vm664 = vcmp.le.f32.partialorder %v663, 0.99
    %v665 = vsel %vm664, 1, 0
    %v666 = vcvt.s32.f32 %v665
    %v667 = vmul.f32 %v532, %v666
    %669 = vrot.lane.b32.xlu0 %v630, 32
    %v670 = vpop.permute.xlu0 %669
    %v671 = vsel %vm125, %v670, 0
    %673 = vmatprep.subr.mxu0 0.0
    %674 = vmatpush1.msra.mxu0 %v41
    %675 = vmatprep.subr.mxu0 0.0
    %676 = vmatpush1.msra.mxu0 %v42
    %677 = vmatprep.subr.mxu0 0.0
    %678 = vmatpush1.msra.mxu0 %v43
    %679 = vmatprep.subr.mxu0 0.0
    %680 = vmatpush1.msra.mxu0 %v44
    %681 = vmatprep.subr.mxu0 0.0
    %682 = vmatpush1.msra.mxu0 0.0
    %683 = vmatprep.subr.mxu0 0.0
    %684 = vmatpush1.msra.mxu0 0.0
    %685 = vmatprep.subr.mxu0 0.0
    %686 = vmatpush1.msra.mxu0 0.0
    %687 = vmatprep.subr.mxu0 0.0
    %688 = vmatpush1.msra.mxu0 0.0
    %689 = vmatprep.subr.mxu0 0.0
    %690 = vmatpush1.msra.mxu0 0.0
    %691 = vmatprep.subr.mxu0 0.0
    %692 = vmatpush1.msra.mxu0 0.0
    %693 = vmatprep.subr.mxu0 0.0
    %694 = vmatpush1.msra.mxu0 0.0
    %695 = vmatprep.subr.mxu0 0.0
    %696 = vmatpush1.msra.mxu0 0.0
    %697 = vmatprep.subr.mxu0 0.0
    %698 = vmatpush1.msra.mxu0 0.0
    %699 = vmatprep.subr.mxu0 0.0
    %700 = vmatpush1.msra.mxu0 0.0
    %701 = vmatprep.subr.mxu0 0.0
    %702 = vmatpush1.msra.mxu0 0.0
    %703 = vmatprep.subr.mxu0 0.0
    %704 = vmatpush1.msra.mxu0 0.0
    %705 = vmatprep.subr.mxu0 0.0
    %706 = vmatpush1.msra.mxu0 0.0
    %707 = vmatprep.subr.mxu0 0.0
    %708 = vmatpush1.msra.mxu0 0.0
    %709 = vmatprep.subr.mxu0 0.0
    %710 = vmatpush1.msra.mxu0 0.0
    %711 = vmatprep.subr.mxu0 0.0
    %712 = vmatpush1.msra.mxu0 0.0
    %713 = vmatprep.subr.mxu0 0.0
    %714 = vmatpush1.msra.mxu0 0.0
    %715 = vmatprep.subr.mxu0 0.0
    %716 = vmatpush1.msra.mxu0 0.0
    %717 = vmatprep.subr.mxu0 0.0
    %718 = vmatpush1.msra.mxu0 0.0
    %719 = vmatprep.subr.mxu0 0.0
    %720 = vmatpush1.msra.mxu0 0.0
    %721 = vmatprep.subr.mxu0 0.0
    %722 = vmatpush1.msra.mxu0 0.0
    %723 = vmatprep.subr.mxu0 0.0
    %724 = vmatpush1.msra.mxu0 0.0
    %725 = vmatprep.subr.mxu0 0.0
    %726 = vmatpush1.msra.mxu0 0.0
    %727 = vmatprep.subr.mxu0 0.0
    %728 = vmatpush1.msra.mxu0 0.0
    %729 = vmatprep.subr.mxu0 0.0
    %730 = vmatpush1.msra.mxu0 0.0
    %731 = vmatprep.subr.mxu0 0.0
    %732 = vmatpush1.msra.mxu0 0.0
    %733 = vmatprep.subr.mxu0 0.0
    %734 = vmatpush1.msra.mxu0 0.0
    %735 = vmatprep.subr.mxu0 0.0
    %736 = vmatpush1.msra.mxu0 0.0
    %737 = vmatprep.mubr.f32.mxu0 0.0
    %738 = vmatmul.mubr.f32.gmra.mrb[0].mxu0 %v671
    %v739 = vpop.f32.mrb[0].mxu0
    %v740 = vadd.f32 0.0, %v739
    %v741 = vpop.f32.mrb[0].mxu0
    %742 = vdwg.mxu0
    %v743 = vadd.f32 %v122, %v740
    %v744 = vmul.f32 %v743, 0.5
    %v745 = vtanh.pop %v744
    %v746 = vmul.f32 %v745, 0.5
    %v747 = vadd.f32 %v746, 0.5
    %v748 = vtanh.pop %v743
    %v749 = vmul.f32 %v747, %v624
    %751 = vrot.lane.b32.xlu0 %v748, 64
    %v752 = vpop.permute.xlu0 %751
    %v754 = vmul.f32 %v747, %v752
    %756 = vrot.lane.b32.xlu0 %v754, 32
    %v757 = vpop.permute.xlu0 %756
    %v759 = vadd.f32 %v749, %v757
    %v760 = vtanh.pop %v759
    %762 = vrot.lane.b32.xlu0 %v760, 64
    %v763 = vpop.permute.xlu0 %762
    %v765 = vmul.f32 %v747, %v763
    %v766 = vmul.f32 %v765, %v228
    %768 = vrot.lane.b32.xlu0 %v766, 32
    %v769 = vpop.permute.xlu0 %768
    %v771 = vsel %vm235, %v769, 0.0
    %772 = vadd.xlane.f32.xlu0 %v771
    %v773 = vpop.xlane.xlu0 %772
    %v774 = vadd.f32 %v773, %v225
    %v775 = vmul.f32 %v774, 0.5
    %v776 = vtanh.pop %v775
    %v777 = vmul.f32 %v776, 0.5
    %v778 = vadd.f32 %v777, 0.5
    %v779 = vmul.f32 %v778, %v647
    %v780 = vmul.f32 %v667, %v779
    %v781 = vadd.f32 %v646, %v780
    %v782 = vsub.f32 1.0, %v781
    %v783 = vmul.f32 %v667, %v782
    %v784 = vadd.f32 %v649, %v783
    %v785 = vadd.f32 %v650, %v667
    %v786 = vmul.f32 %v667, %v765
    %v787 = vadd.f32 %v652, %v786
    %v788 = vsel %vm248, %v781, inf
    %789 = vmin.xlane.f32.xlu0 %v788
    %v790 = vpop.xlane.xlu0 %789
    %v791 = vrot.slane %v790, 4
    %v792 = vmin.f32 %v790, %v791
    %v793 = vrot.slane %v792, 2
    %v794 = vmin.f32 %v792, %v793
    %v795 = vrot.slane %v794, 1
    %v796 = vmin.f32 %v794, %v795
    %s797 = vtos %v796
    %v798 = vstv %s797
    %vm799 = vcmp.le.f32.partialorder %v798, 0.99
    %v800 = vsel %vm799, 1, 0
    %v801 = vcvt.s32.f32 %v800
    %v802 = vmul.f32 %v667, %v801
    %804 = vrot.lane.b32.xlu0 %v765, 32
    %v805 = vpop.permute.xlu0 %804
    %v806 = vsel %vm125, %v805, 0
    %808 = vmatprep.subr.mxu0 0.0
    %809 = vmatpush1.msra.mxu0 %v41
    %810 = vmatprep.subr.mxu0 0.0
    %811 = vmatpush1.msra.mxu0 %v42
    %812 = vmatprep.subr.mxu0 0.0
    %813 = vmatpush1.msra.mxu0 %v43
    %814 = vmatprep.subr.mxu0 0.0
    %815 = vmatpush1.msra.mxu0 %v44
    %816 = vmatprep.subr.mxu0 0.0
    %817 = vmatpush1.msra.mxu0 0.0
    %818 = vmatprep.subr.mxu0 0.0
    %819 = vmatpush1.msra.mxu0 0.0
    %820 = vmatprep.subr.mxu0 0.0
    %821 = vmatpush1.msra.mxu0 0.0
    %822 = vmatprep.subr.mxu0 0.0
    %823 = vmatpush1.msra.mxu0 0.0
    %824 = vmatprep.subr.mxu0 0.0
    %825 = vmatpush1.msra.mxu0 0.0
    %826 = vmatprep.subr.mxu0 0.0
    %827 = vmatpush1.msra.mxu0 0.0
    %828 = vmatprep.subr.mxu0 0.0
    %829 = vmatpush1.msra.mxu0 0.0
    %830 = vmatprep.subr.mxu0 0.0
    %831 = vmatpush1.msra.mxu0 0.0
    %832 = vmatprep.subr.mxu0 0.0
    %833 = vmatpush1.msra.mxu0 0.0
    %834 = vmatprep.subr.mxu0 0.0
    %835 = vmatpush1.msra.mxu0 0.0
    %836 = vmatprep.subr.mxu0 0.0
    %837 = vmatpush1.msra.mxu0 0.0
    %838 = vmatprep.subr.mxu0 0.0
    %839 = vmatpush1.msra.mxu0 0.0
    %840 = vmatprep.subr.mxu0 0.0
    %841 = vmatpush1.msra.mxu0 0.0
    %842 = vmatprep.subr.mxu0 0.0
    %843 = vmatpush1.msra.mxu0 0.0
    %844 = vmatprep.subr.mxu0 0.0
    %845 = vmatpush1.msra.mxu0 0.0
    %846 = vmatprep.subr.mxu0 0.0
    %847 = vmatpush1.msra.mxu0 0.0
    %848 = vmatprep.subr.mxu0 0.0
    %849 = vmatpush1.msra.mxu0 0.0
    %850 = vmatprep.subr.mxu0 0.0
    %851 = vmatpush1.msra.mxu0 0.0
    %852 = vmatprep.subr.mxu0 0.0
    %853 = vmatpush1.msra.mxu0 0.0
    %854 = vmatprep.subr.mxu0 0.0
    %855 = vmatpush1.msra.mxu0 0.0
    %856 = vmatprep.subr.mxu0 0.0
    %857 = vmatpush1.msra.mxu0 0.0
    %858 = vmatprep.subr.mxu0 0.0
    %859 = vmatpush1.msra.mxu0 0.0
    %860 = vmatprep.subr.mxu0 0.0
    %861 = vmatpush1.msra.mxu0 0.0
    %862 = vmatprep.subr.mxu0 0.0
    %863 = vmatpush1.msra.mxu0 0.0
    %864 = vmatprep.subr.mxu0 0.0
    %865 = vmatpush1.msra.mxu0 0.0
    %866 = vmatprep.subr.mxu0 0.0
    %867 = vmatpush1.msra.mxu0 0.0
    %868 = vmatprep.subr.mxu0 0.0
    %869 = vmatpush1.msra.mxu0 0.0
    %870 = vmatprep.subr.mxu0 0.0
    %871 = vmatpush1.msra.mxu0 0.0
    %872 = vmatprep.mubr.f32.mxu0 0.0
    %873 = vmatmul.mubr.f32.gmra.mrb[0].mxu0 %v806
    %v874 = vpop.f32.mrb[0].mxu0
    %v875 = vadd.f32 0.0, %v874
    %v876 = vpop.f32.mrb[0].mxu0
    %877 = vdwg.mxu0
    %v878 = vadd.f32 %v122, %v875
    %v879 = vmul.f32 %v878, 0.5
    %v880 = vtanh.pop %v879
    %v881 = vmul.f32 %v880, 0.5
    %v882 = vadd.f32 %v881, 0.5
    %v883 = vtanh.pop %v878
    %v884 = vmul.f32 %v882, %v759
    %886 = vrot.lane.b32.xlu0 %v883, 64
    %v887 = vpop.permute.xlu0 %886
    %v889 = vmul.f32 %v882, %v887
    %891 = vrot.lane.b32.xlu0 %v889, 32
    %v892 = vpop.permute.xlu0 %891
    %v894 = vadd.f32 %v884, %v892
    %v895 = vtanh.pop %v894
    %897 = vrot.lane.b32.xlu0 %v895, 64
    %v898 = vpop.permute.xlu0 %897
    %v900 = vmul.f32 %v882, %v898
    %v901 = vmul.f32 %v900, %v228
    %903 = vrot.lane.b32.xlu0 %v901, 32
    %v904 = vpop.permute.xlu0 %903
    %v906 = vsel %vm235, %v904, 0.0
    %907 = vadd.xlane.f32.xlu0 %v906
    %v908 = vpop.xlane.xlu0 %907
    %v909 = vadd.f32 %v908, %v225
    %v910 = vmul.f32 %v909, 0.5
    %v911 = vtanh.pop %v910
    %v912 = vmul.f32 %v911, 0.5
    %v913 = vadd.f32 %v912, 0.5
    %v914 = vmul.f32 %v913, %v782
    %v915 = vmul.f32 %v802, %v914
    %v916 = vadd.f32 %v781, %v915
    %v917 = vsub.f32 1.0, %v916
    %v918 = vmul.f32 %v802, %v917
    %v919 = vadd.f32 %v784, %v918
    %v920 = vadd.f32 %v785, %v802
    %v921 = vmul.f32 %v802, %v900
    %v922 = vadd.f32 %v787, %v921
    %v923 = vsel %vm248, %v916, inf
    %924 = vmin.xlane.f32.xlu0 %v923
    %v925 = vpop.xlane.xlu0 %924
    %v926 = vrot.slane %v925, 4
    %v927 = vmin.f32 %v925, %v926
    %v928 = vrot.slane %v927, 2
    %v929 = vmin.f32 %v927, %v928
    %v930 = vrot.slane %v929, 1
    %v931 = vmin.f32 %v929, %v930
    %s932 = vtos %v931
    %v933 = vstv %s932
    %vm934 = vcmp.le.f32.partialorder %v933, 0.99
    %v935 = vsel %vm934, 1, 0
    %v936 = vcvt.s32.f32 %v935
    %v937 = vmul.f32 %v802, %v936
    %939 = vrot.lane.b32.xlu0 %v900, 32
    %v940 = vpop.permute.xlu0 %939
    %v941 = vsel %vm125, %v940, 0
    %943 = vmatprep.subr.mxu0 0.0
    %944 = vmatpush1.msra.mxu0 %v41
    %945 = vmatprep.subr.mxu0 0.0
    %946 = vmatpush1.msra.mxu0 %v42
    %947 = vmatprep.subr.mxu0 0.0
    %948 = vmatpush1.msra.mxu0 %v43
    %949 = vmatprep.subr.mxu0 0.0
    %950 = vmatpush1.msra.mxu0 %v44
    %951 = vmatprep.subr.mxu0 0.0
    %952 = vmatpush1.msra.mxu0 0.0
    %953 = vmatprep.subr.mxu0 0.0
    %954 = vmatpush1.msra.mxu0 0.0
    %955 = vmatprep.subr.mxu0 0.0
    %956 = vmatpush1.msra.mxu0 0.0
    %957 = vmatprep.subr.mxu0 0.0
    %958 = vmatpush1.msra.mxu0 0.0
    %959 = vmatprep.subr.mxu0 0.0
    %960 = vmatpush1.msra.mxu0 0.0
    %961 = vmatprep.subr.mxu0 0.0
    %962 = vmatpush1.msra.mxu0 0.0
    %963 = vmatprep.subr.mxu0 0.0
    %964 = vmatpush1.msra.mxu0 0.0
    %965 = vmatprep.subr.mxu0 0.0
    %966 = vmatpush1.msra.mxu0 0.0
    %967 = vmatprep.subr.mxu0 0.0
    %968 = vmatpush1.msra.mxu0 0.0
    %969 = vmatprep.subr.mxu0 0.0
    %970 = vmatpush1.msra.mxu0 0.0
    %971 = vmatprep.subr.mxu0 0.0
    %972 = vmatpush1.msra.mxu0 0.0
    %973 = vmatprep.subr.mxu0 0.0
    %974 = vmatpush1.msra.mxu0 0.0
    %975 = vmatprep.subr.mxu0 0.0
    %976 = vmatpush1.msra.mxu0 0.0
    %977 = vmatprep.subr.mxu0 0.0
    %978 = vmatpush1.msra.mxu0 0.0
    %979 = vmatprep.subr.mxu0 0.0
    %980 = vmatpush1.msra.mxu0 0.0
    %981 = vmatprep.subr.mxu0 0.0
    %982 = vmatpush1.msra.mxu0 0.0
    %983 = vmatprep.subr.mxu0 0.0
    %984 = vmatpush1.msra.mxu0 0.0
    %985 = vmatprep.subr.mxu0 0.0
    %986 = vmatpush1.msra.mxu0 0.0
    %987 = vmatprep.subr.mxu0 0.0
    %988 = vmatpush1.msra.mxu0 0.0
    %989 = vmatprep.subr.mxu0 0.0
    %990 = vmatpush1.msra.mxu0 0.0
    %991 = vmatprep.subr.mxu0 0.0
    %992 = vmatpush1.msra.mxu0 0.0
    %993 = vmatprep.subr.mxu0 0.0
    %994 = vmatpush1.msra.mxu0 0.0
    %995 = vmatprep.subr.mxu0 0.0
    %996 = vmatpush1.msra.mxu0 0.0
    %997 = vmatprep.subr.mxu0 0.0
    %998 = vmatpush1.msra.mxu0 0.0
    %999 = vmatprep.subr.mxu0 0.0
    %1000 = vmatpush1.msra.mxu0 0.0
    %1001 = vmatprep.subr.mxu0 0.0
    %1002 = vmatpush1.msra.mxu0 0.0
    %1003 = vmatprep.subr.mxu0 0.0
    %1004 = vmatpush1.msra.mxu0 0.0
    %1005 = vmatprep.subr.mxu0 0.0
    %1006 = vmatpush1.msra.mxu0 0.0
    %1007 = vmatprep.mubr.f32.mxu0 0.0
    %1008 = vmatmul.mubr.f32.gmra.mrb[0].mxu0 %v941
    %v1009 = vpop.f32.mrb[0].mxu0
    %v1010 = vadd.f32 0.0, %v1009
    %v1011 = vpop.f32.mrb[0].mxu0
    %1012 = vdwg.mxu0
    %v1013 = vadd.f32 %v122, %v1010
    %v1014 = vmul.f32 %v1013, 0.5
    %v1015 = vtanh.pop %v1014
    %v1016 = vmul.f32 %v1015, 0.5
    %v1017 = vadd.f32 %v1016, 0.5
    %v1018 = vtanh.pop %v1013
    %v1019 = vmul.f32 %v1017, %v894
    %1021 = vrot.lane.b32.xlu0 %v1018, 64
    %v1022 = vpop.permute.xlu0 %1021
    %v1024 = vmul.f32 %v1017, %v1022
    %1026 = vrot.lane.b32.xlu0 %v1024, 32
    %v1027 = vpop.permute.xlu0 %1026
    %v1029 = vadd.f32 %v1019, %v1027
    %v1030 = vtanh.pop %v1029
    %1032 = vrot.lane.b32.xlu0 %v1030, 64
    %v1033 = vpop.permute.xlu0 %1032
    %v1035 = vmul.f32 %v1017, %v1033
    %v1036 = vmul.f32 %v1035, %v228
    %1038 = vrot.lane.b32.xlu0 %v1036, 32
    %v1039 = vpop.permute.xlu0 %1038
    %v1041 = vsel %vm235, %v1039, 0.0
    %1042 = vadd.xlane.f32.xlu0 %v1041
    %v1043 = vpop.xlane.xlu0 %1042
    %v1044 = vadd.f32 %v1043, %v225
    %v1045 = vmul.f32 %v1044, 0.5
    %v1046 = vtanh.pop %v1045
    %v1047 = vmul.f32 %v1046, 0.5
    %v1048 = vadd.f32 %v1047, 0.5
    %v1049 = vmul.f32 %v1048, %v917
    %v1050 = vmul.f32 %v937, %v1049
    %v1051 = vadd.f32 %v916, %v1050
    %v1052 = vsub.f32 1.0, %v1051
    %v1053 = vmul.f32 %v937, %v1052
    %v1054 = vadd.f32 %v919, %v1053
    %v1055 = vadd.f32 %v920, %v937
    %v1056 = vmul.f32 %v937, %v1035
    %v1057 = vadd.f32 %v922, %v1056
    %v1058 = vsel %vm248, %v1051, inf
    %1059 = vmin.xlane.f32.xlu0 %v1058
    %v1060 = vpop.xlane.xlu0 %1059
    %v1061 = vrot.slane %v1060, 4
    %v1062 = vmin.f32 %v1060, %v1061
    %v1063 = vrot.slane %v1062, 2
    %v1064 = vmin.f32 %v1062, %v1063
    %v1065 = vrot.slane %v1064, 1
    %v1066 = vmin.f32 %v1064, %v1065
    %s1067 = vtos %v1066
    %v1068 = vstv %s1067
    %vm1069 = vcmp.le.f32.partialorder %v1068, 0.99
    %v1070 = vsel %vm1069, 1, 0
    %v1071 = vcvt.s32.f32 %v1070
    %v1072 = vmul.f32 %v937, %v1071
    %1074 = vrot.lane.b32.xlu0 %v1035, 32
    %v1075 = vpop.permute.xlu0 %1074
    %v1076 = vsel %vm125, %v1075, 0
    %1078 = vmatprep.subr.mxu0 0.0
    %1079 = vmatpush1.msra.mxu0 %v41
    %1080 = vmatprep.subr.mxu0 0.0
    %1081 = vmatpush1.msra.mxu0 %v42
    %1082 = vmatprep.subr.mxu0 0.0
    %1083 = vmatpush1.msra.mxu0 %v43
    %1084 = vmatprep.subr.mxu0 0.0
    %1085 = vmatpush1.msra.mxu0 %v44
    %1086 = vmatprep.subr.mxu0 0.0
    %1087 = vmatpush1.msra.mxu0 0.0
    %1088 = vmatprep.subr.mxu0 0.0
    %1089 = vmatpush1.msra.mxu0 0.0
    %1090 = vmatprep.subr.mxu0 0.0
    %1091 = vmatpush1.msra.mxu0 0.0
    %1092 = vmatprep.subr.mxu0 0.0
    %1093 = vmatpush1.msra.mxu0 0.0
    %1094 = vmatprep.subr.mxu0 0.0
    %1095 = vmatpush1.msra.mxu0 0.0
    %1096 = vmatprep.subr.mxu0 0.0
    %1097 = vmatpush1.msra.mxu0 0.0
    %1098 = vmatprep.subr.mxu0 0.0
    %1099 = vmatpush1.msra.mxu0 0.0
    %1100 = vmatprep.subr.mxu0 0.0
    %1101 = vmatpush1.msra.mxu0 0.0
    %1102 = vmatprep.subr.mxu0 0.0
    %1103 = vmatpush1.msra.mxu0 0.0
    %1104 = vmatprep.subr.mxu0 0.0
    %1105 = vmatpush1.msra.mxu0 0.0
    %1106 = vmatprep.subr.mxu0 0.0
    %1107 = vmatpush1.msra.mxu0 0.0
    %1108 = vmatprep.subr.mxu0 0.0
    %1109 = vmatpush1.msra.mxu0 0.0
    %1110 = vmatprep.subr.mxu0 0.0
    %1111 = vmatpush1.msra.mxu0 0.0
    %1112 = vmatprep.subr.mxu0 0.0
    %1113 = vmatpush1.msra.mxu0 0.0
    %1114 = vmatprep.subr.mxu0 0.0
    %1115 = vmatpush1.msra.mxu0 0.0
    %1116 = vmatprep.subr.mxu0 0.0
    %1117 = vmatpush1.msra.mxu0 0.0
    %1118 = vmatprep.subr.mxu0 0.0
    %1119 = vmatpush1.msra.mxu0 0.0
    %1120 = vmatprep.subr.mxu0 0.0
    %1121 = vmatpush1.msra.mxu0 0.0
    %1122 = vmatprep.subr.mxu0 0.0
    %1123 = vmatpush1.msra.mxu0 0.0
    %1124 = vmatprep.subr.mxu0 0.0
    %1125 = vmatpush1.msra.mxu0 0.0
    %1126 = vmatprep.subr.mxu0 0.0
    %1127 = vmatpush1.msra.mxu0 0.0
    %1128 = vmatprep.subr.mxu0 0.0
    %1129 = vmatpush1.msra.mxu0 0.0
    %1130 = vmatprep.subr.mxu0 0.0
    %1131 = vmatpush1.msra.mxu0 0.0
    %1132 = vmatprep.subr.mxu0 0.0
    %1133 = vmatpush1.msra.mxu0 0.0
    %1134 = vmatprep.subr.mxu0 0.0
    %1135 = vmatpush1.msra.mxu0 0.0
    %1136 = vmatprep.subr.mxu0 0.0
    %1137 = vmatpush1.msra.mxu0 0.0
    %1138 = vmatprep.subr.mxu0 0.0
    %1139 = vmatpush1.msra.mxu0 0.0
    %1140 = vmatprep.subr.mxu0 0.0
    %1141 = vmatpush1.msra.mxu0 0.0
    %1142 = vmatprep.mubr.f32.mxu0 0.0
    %1143 = vmatmul.mubr.f32.gmra.mrb[0].mxu0 %v1076
    %v1144 = vpop.f32.mrb[0].mxu0
    %v1145 = vadd.f32 0.0, %v1144
    %v1146 = vpop.f32.mrb[0].mxu0
    %1147 = vdwg.mxu0
    %v1148 = vadd.f32 %v122, %v1145
    %v1149 = vmul.f32 %v1148, 0.5
    %v1150 = vtanh.pop %v1149
    %v1151 = vmul.f32 %v1150, 0.5
    %v1152 = vadd.f32 %v1151, 0.5
    %v1153 = vtanh.pop %v1148
    %v1154 = vmul.f32 %v1152, %v1029
    %1156 = vrot.lane.b32.xlu0 %v1153, 64
    %v1157 = vpop.permute.xlu0 %1156
    %v1159 = vmul.f32 %v1152, %v1157
    %1161 = vrot.lane.b32.xlu0 %v1159, 32
    %v1162 = vpop.permute.xlu0 %1161
    %v1164 = vadd.f32 %v1154, %v1162
    %v1165 = vtanh.pop %v1164
    %1167 = vrot.lane.b32.xlu0 %v1165, 64
    %v1168 = vpop.permute.xlu0 %1167
    %v1170 = vmul.f32 %v1152, %v1168
    %v1171 = vmul.f32 %v1170, %v228
    %1173 = vrot.lane.b32.xlu0 %v1171, 32
    %v1174 = vpop.permute.xlu0 %1173
    %v1176 = vsel %vm235, %v1174, 0.0
    %1177 = vadd.xlane.f32.xlu0 %v1176
    %v1178 = vpop.xlane.xlu0 %1177
    %v1179 = vadd.f32 %v1178, %v225
    %v1180 = vmul.f32 %v1179, 0.5
    %v1181 = vtanh.pop %v1180
    %v1182 = vmul.f32 %v1181, 0.5
    %v1183 = vadd.f32 %v1182, 0.5
    %v1184 = vmul.f32 %v1183, %v1052
    %v1185 = vmul.f32 %v1072, %v1184
    %v1186 = vadd.f32 %v1051, %v1185
    %v1187 = vsub.f32 1.0, %v1186
    %v1188 = vmul.f32 %v1072, %v1187
    %v1189 = vadd.f32 %v1054, %v1188
    %v1190 = vadd.f32 %v1055, %v1072
    %v1191 = vmul.f32 %v1072, %v1170
    %v1192 = vadd.f32 %v1057, %v1191
    %1194 = vset.pattern.permute.xlu0 32
    %1195 = vperm.xlu0 %1194, %v1189
    %v1196 = vpop.permute.xlu0 %1195
    %v1198 = vmul.f32 %v1192, %v1196
    %v1199 = vrcp.pop %v1190
    %v1200 = vmul.f32 %v1198, %v1199
    %1201 = vst [vmem:[#allocation7] sm:$0x3] 0.0
    %1203 = vrot.lane.b32.xlu0 %v1200, 32
    %v1204 = vpop.permute.xlu0 %1203
    %1206 = vst.msk [vmem:[#allocation7] sm:$0x3] %vm235, %v1204
    %1207 = vst.msk [vmem:[#allocation7] sm:$0x3] %vm248, %v1186
    %vm1208 = vcmask 271624
    %1209 = vst.msk [vmem:[#allocation7] sm:$0x3] %vm1208, %v1190
    // Predicated region
    $region18: #{tpu_custom_call.1} parent=1 // pred_check
      _
    $region19: #{tpu_custom_call.1} parent=1 // pred_check_branch
      %1211 = sbr.rel (0) target = $region21
    $region20: #{tpu_custom_call.1} parent=1 // pred_region
      %s1213 = ssub.s32 32, 32
      %1214 = vsyncadd [#allocation4], %s1213
      %s1216 = sshll.u32 [#allocation7], 4
      %s1217 = int_to_ptr.vmem [resolvable:$true] %s1216
      %1219 = dma.vmem_to_hbm [thread:$0]  %s1217, 32, %s2, [#allocation4]
    $region21: #{tpu_custom_call.1} parent=1 // pred_fallthru
      _
    // Predicated region
    $region22: #{tpu_custom_call.1} parent=1 // pred_check
      _
    $region23: #{tpu_custom_call.1} parent=1 // pred_check_branch
      %1221 = sbr.rel (0) target = $region25
    $region24: #{tpu_custom_call.1} parent=1 // pred_region
      %1222 = dma.done [#allocation4], 32
    $region25: #{tpu_custom_call.1} parent=1 // pred_fallthru
      _
    %1223 = vsyncpa [#allocation3], 1
    %1224 = vsyncpa [#allocation6], 1
    %1225 = vsyncpa [#allocation4], 1

</llo_original>
